<compile_context>
chip_gen: v7x
topology: tpu7x:2x2x1
jax: 0.10.0
libtpu: 0.0.40
codegen_flags: <defaults>
</compile_context>

<pallas_src>
import functools

import jax
import jax.numpy as jnp
from jax import lax
from jax.experimental import pallas as pl
from jax.experimental.pallas import tpu as pltpu

EPS = 1e-5


def _round_up(n, m):
    return ((n + m - 1) // m) * m


# ----------------------------------------------------------------------------
# Pallas kernel: whole forward pass for one batch tile (BT elements).
# ----------------------------------------------------------------------------
def _cen_kernel(num_blocks, time_window, b_tile,
                x_ref, w1_ref, b1_ref, wb_ref, bb_ref,
                wr_ref, br_ref, wo_ref, bo_ref, o_ref):
    T, BT = time_window, b_tile
    L = T * BT                                       # lane extent of a slab

    x = x_ref[0]                                     # (3C, L) bf16

    # --- conv1 (BN scale folded into weights) + ReLU ------------------------
    y = jnp.dot(w1_ref[...], x, preferred_element_type=jnp.float32)
    y = jnp.maximum(y + b1_ref[...], 0.0)            # (F, L) f32
    # Dropout(p=0.25): identity in eval mode.

    # --- residual dilated blocks (k=5, dilation=2, ReplicationPad1d(4)) -----
    # Static Python loop is fine for num_blocks <= ~4; switch to
    # lax.fori_loop(unroll=True) with dynamic wb_ref[i] indexing if it grows.
    for i in range(num_blocks):
        yb = y.astype(jnp.bfloat16)
        left = yb[:, 0:BT]                           # time slab t = 0
        right = yb[:, L - BT:L]                      # time slab t = T-1
        # Lane concat of 128-multiple-wide pieces -> vreg-aligned copies.
        ypad = jnp.concatenate([left] * 4 + [yb] + [right] * 4, axis=1)
        # Taps: aligned lane slices; stack along sublanes -> (5F, L).
        taps = [ypad[:, 2 * k * BT: 2 * k * BT + L] for k in range(5)]
        ycat = jnp.concatenate(taps, axis=0)         # (5F, L) bf16
        z = jnp.dot(wb_ref[i], ycat, preferred_element_type=jnp.float32)
        z = jnp.maximum(z + bb_ref[i], 0.0)          # folded BN bias + ReLU
        y = y + z                                    # residual (f32)

    # --- reduce: Conv1d(kernel=T) as one (F, T*F) @ (T*F, BT) matmul --------
    yb = y.astype(jnp.bfloat16)
    ycat_r = jnp.concatenate(
        [yb[:, t * BT:(t + 1) * BT] for t in range(T)], axis=0)   # (T*F, BT)
    r = jnp.dot(wr_ref[...], ycat_r, preferred_element_type=jnp.float32)
    r = jnp.maximum(r + br_ref[...], 0.0)            # (F, BT) f32

    # --- Linear + Sigmoid, stored lane-dense as (OUT, BT) -------------------
    o = jnp.dot(wo_ref[...], r.astype(jnp.bfloat16),
                preferred_element_type=jnp.float32) + bo_ref[...]
    o_ref[0] = jax.nn.sigmoid(o)                     # (OUT, BT)


# ----------------------------------------------------------------------------
# Wrapper: batch tiling, conv1 tap-stacking, pallas_call.
# ----------------------------------------------------------------------------
def contact_estimation_forward(x, kparams, *, num_blocks, time_window,
                               b_tile=256):
    B, T, C = x.shape
    assert T == time_window
    (w1f, b1, wbf, bb, wrf, br, wo, bo) = kparams
    F = w1f.shape[0]
    OUT = wo.shape[0]

    # Batch tile: multiple of 128 so tap lane-slices are vreg aligned; cap so
    # large batches yield >= 2 grid steps (v7x megacore).
    BT = max(128, _round_up(min(b_tile, B), 128))
    if B > 128:
        BT = min(BT, max(128, _round_up((B + 1) // 2, 128)))
    B_pad = _round_up(B, BT)
    G = B_pad // BT

    # conv1 edge-pad + tap-stack in plain XLA, then pack to (G, 3C, T*BT)
    # with rows = (tap, channel) and lanes = (time-major, batch-minor).
    xpad = jnp.pad(x, ((0, 0), (1, 1), (0, 0)), mode="edge")       # (B, T+2, C)
    taps = jnp.stack([xpad[:, k:k + T, :] for k in range(3)], axis=1)  # (B,3,T,C)
    if B_pad != B:
        taps = jnp.pad(taps, ((0, B_pad - B), (0, 0), (0, 0), (0, 0)))
    taps = jnp.transpose(taps, (1, 3, 2, 0))          # (3, C, T, B_pad)
    taps = taps.reshape(3, C, T, G, BT)
    taps = jnp.transpose(taps, (3, 0, 1, 2, 4))       # (G, 3, C, T, BT)
    xtap = taps.reshape(G, 3 * C, T * BT).astype(jnp.bfloat16)

    kern = functools.partial(_cen_kernel, num_blocks, T, BT)

    def full_spec(a):
        nd = a.ndim
        return pl.BlockSpec(a.shape, lambda g, _n=nd: (0,) * _n)

    flops = G * (2 * T * BT * 3 * C * F
                 + num_blocks * 2 * T * BT * 5 * F * F
                 + 2 * BT * T * F * F
                 + 2 * BT * F * OUT)
    bytes_accessed = (int(xtap.size) * 2 + G * BT * OUT * 4
                      + sum(int(a.size) * a.dtype.itemsize for a in kparams))

    out = pl.pallas_call(
        kern,
        out_shape=jax.ShapeDtypeStruct((G, OUT, BT), jnp.float32),
        grid=(G,),
        in_specs=[
            pl.BlockSpec((1, 3 * C, T * BT), lambda g: (g, 0, 0)),
            full_spec(w1f), full_spec(b1),
            full_spec(wbf), full_spec(bb),
            full_spec(wrf), full_spec(br),
            full_spec(wo), full_spec(bo),
        ],
        out_specs=pl.BlockSpec((1, OUT, BT), lambda g: (g, 0, 0)),
        compiler_params=pltpu.CompilerParams(
            dimension_semantics=("parallel",)),
        cost_estimate=pl.CostEstimate(
            flops=flops, transcendentals=G * BT * OUT,
            bytes_accessed=bytes_accessed),
    )(xtap, w1f, b1, wbf, bb, wrf, br, wo, bo)

    # (G, OUT, BT) -> (B, OUT)
    out = jnp.transpose(out, (0, 2, 1)).reshape(G * BT, OUT)
    return out[:B]


# ----------------------------------------------------------------------------
# Deterministic parameter init (PyTorch layout) + kernel repacking (BN folded,
# batch-on-lanes "W @ X" layout).
# ----------------------------------------------------------------------------
def init_params(key, in_channels, num_features, out_channels, time_window,
                num_blocks):
    F, C, T, NB, OUT = (num_features, in_channels, time_window, num_blocks,
                        out_channels)
    ks = jax.random.split(key, 14)

    def rnd(k, shape, scale=0.05):
        return scale * jax.random.normal(k, shape, jnp.float32)

    # conv1 (out, in, k) + BN stats
    w1 = rnd(ks[0], (F, C, 3))
    g1 = 1.0 + rnd(ks[1], (F,))
    be1 = rnd(ks[2], (F,))
    m1 = rnd(ks[3], (F,))
    v1 = 1.0 + jnp.abs(rnd(ks[4], (F,)))
    # residual blocks (dilated conv, no bias) + BN stats
    wb = rnd(ks[5], (NB, F, F, 5))
    gb = 1.0 + rnd(ks[6], (NB, F))
    beb = rnd(ks[7], (NB, F))
    mb = rnd(ks[8], (NB, F))
    vb = 1.0 + jnp.abs(rnd(ks[9], (NB, F)))
    # reduce conv (out, in, T) + bias
    wr = rnd(ks[10], (F, F, T))
    br = rnd(ks[11], (F,))
    # linear (out, in) + bias
    wo = rnd(ks[12], (OUT, F))
    bo = rnd(ks[13], (OUT,))

    torch_params = (w1, g1, be1, m1, v1, wb, gb, beb, mb, vb, wr, br, wo, bo)

    # --- repack for the kernel: fold BN scale, flatten taps, cast to bf16 ---
    s1 = g1 / jnp.sqrt(v1 + EPS)                                   # (F,)
    b1f = be1 - m1 * s1
    w1f = jnp.transpose(w1, (0, 2, 1)).reshape(F, 3 * C) * s1[:, None]

    sb_ = gb / jnp.sqrt(vb + EPS)                                  # (NB, F)
    bbf = beb - mb * sb_
    wbf = (jnp.transpose(wb, (0, 1, 3, 2)).reshape(NB, F, 5 * F)
           * sb_[:, :, None])

    wrf = jnp.transpose(wr, (0, 2, 1)).reshape(F, T * F)

    kparams = (
        w1f.astype(jnp.bfloat16),
        b1f.reshape(F, 1).astype(jnp.float32),
        wbf.astype(jnp.bfloat16),
        bbf.reshape(NB, F, 1).astype(jnp.float32),
        wrf.astype(jnp.bfloat16),
        br.reshape(F, 1).astype(jnp.float32),
        wo.astype(jnp.bfloat16),
        bo.reshape(OUT, 1).astype(jnp.float32),
    )
    return torch_params, kparams


# ----------------------------------------------------------------------------
# Pure-JAX reference (mirrors PyTorch eval-mode forward) for verification.
# ----------------------------------------------------------------------------
def reference_forward(x, torch_params, num_blocks):
    (w1, g1, be1, m1, v1, wb, gb, beb, mb, vb, wr, br, wo, bo) = torch_params

    def bn(y, g, be, m, v):
        return ((y - m[None, :, None]) / jnp.sqrt(v[None, :, None] + EPS)
                * g[None, :, None] + be[None, :, None])

    xt = jnp.transpose(x, (0, 2, 1))                              # (B, C, T)
    xp = jnp.pad(xt, ((0, 0), (0, 0), (1, 1)), mode="edge")
    y = lax.conv_general_dilated(xp, w1, (1,), "VALID",
                                 dimension_numbers=("NCH", "OIH", "NCH"))
    y = jax.nn.relu(bn(y, g1, be1, m1, v1))
    for i in range(num_blocks):
        pre = y
        yp = jnp.pad(y, ((0, 0), (0, 0), (4, 4)), mode="edge")
        z = lax.conv_general_dilated(yp, wb[i], (1,), "VALID",
                                     rhs_dilation=(2,),
                                     dimension_numbers=("NCH", "OIH", "NCH"))
        z = jax.nn.relu(bn(z, gb[i], beb[i], mb[i], vb[i]))
        y = pre + z
    r = lax.conv_general_dilated(y, wr, (1,), "VALID",
                                 dimension_numbers=("NCH", "OIH", "NCH"))
    r = jax.nn.relu(r + br[None, :, None])
    B = x.shape[0]
    r = r.reshape(B, -1)
    o = r @ wo.T + bo[None, :]
    return jax.nn.sigmoid(o)


# ----------------------------------------------------------------------------
if __name__ == "__main__":
    # TODO(synk): Dropout / BatchNorm are eval-mode only (identity / folded
    # running stats); training-mode stochasticity is not implemented.
    B = 2
    IN_CHANNELS = 8
    NUM_FEATURES = 32
    OUT_CHANNELS = 8
    TIME_WINDOW = 10
    NUM_BLOCKS = 2

    key = jax.random.PRNGKey(0)
    kx, kx2, kp = jax.random.split(key, 3)
    torch_params, kparams = init_params(
        kp, IN_CHANNELS, NUM_FEATURES, OUT_CHANNELS, TIME_WINDOW, NUM_BLOCKS)

    # Case 1: tiny batch (single padded tile, G=1).
    x = jax.random.normal(kx, (B, TIME_WINDOW, IN_CHANNELS), jnp.float32)
    pred = jax.block_until_ready(contact_estimation_forward(
        x, kparams, num_blocks=NUM_BLOCKS, time_window=TIME_WINDOW))
    ref = jax.block_until_ready(reference_forward(x, torch_params, NUM_BLOCKS))
    assert pred.shape == (B, OUT_CHANNELS), pred.shape
    assert bool(jnp.all(jnp.isfinite(pred)))
    assert bool(jnp.allclose(pred, ref, atol=1e-2, rtol=5e-2)), (
        float(jnp.max(jnp.abs(pred - ref))))

    # Case 2: multiple batch tiles (G=2, exercises the parallel axis).
    B2 = 260
    x2 = jax.random.normal(kx2, (B2, TIME_WINDOW, IN_CHANNELS), jnp.float32)
    pred2 = jax.block_until_ready(contact_estimation_forward(
        x2, kparams, num_blocks=NUM_BLOCKS, time_window=TIME_WINDOW,
        b_tile=256))
    ref2 = jax.block_until_ready(reference_forward(x2, torch_params,
                                                   NUM_BLOCKS))
    assert pred2.shape == (B2, OUT_CHANNELS), pred2.shape
    assert bool(jnp.all(jnp.isfinite(pred2)))
    assert bool(jnp.allclose(pred2, ref2, atol=1e-2, rtol=5e-2)), (
        float(jnp.max(jnp.abs(pred2 - ref2))))

    print("KERNEL_OK")
</pallas_src>

<mosaic_0001>
module attributes {stable_mosaic.version = 11 : i64} {
  func.func @_cen_kernel(%arg0: i32, %arg1: memref<1x24x1280xbf16, #tpu.memory_space<vmem>>, %arg2: memref<32x24xbf16, #tpu.memory_space<vmem>>, %arg3: memref<32x1xf32, #tpu.memory_space<vmem>>, %arg4: memref<2x32x160xbf16, #tpu.memory_space<vmem>>, %arg5: memref<2x32x1xf32, #tpu.memory_space<vmem>>, %arg6: memref<32x320xbf16, #tpu.memory_space<vmem>>, %arg7: memref<32x1xf32, #tpu.memory_space<vmem>>, %arg8: memref<8x32xbf16, #tpu.memory_space<vmem>>, %arg9: memref<8x1xf32, #tpu.memory_space<vmem>>, %arg10: memref<1x8x128xf32, #tpu.memory_space<vmem>>) attributes {dimension_semantics = [#tpu.dimension_semantics<parallel>], iteration_bounds = array<i64: 1>, scalar_prefetch = 0 : i64, scratch_operands = 0 : i64, tpu.core_type = #tpu.core_type<tc>, window_params = [{transform_indices = @transform_0, window_bounds = array<i64: 1, 24, 1280>}, {pipeline_mode = #tpu.pipeline_mode<synchronous>, transform_indices = @transform_1, window_bounds = array<i64: 32, 24>}, {pipeline_mode = #tpu.pipeline_mode<synchronous>, transform_indices = @transform_2, window_bounds = array<i64: 32, 1>}, {pipeline_mode = #tpu.pipeline_mode<synchronous>, transform_indices = @transform_3, window_bounds = array<i64: 2, 32, 160>}, {pipeline_mode = #tpu.pipeline_mode<synchronous>, transform_indices = @transform_4, window_bounds = array<i64: 2, 32, 1>}, {pipeline_mode = #tpu.pipeline_mode<synchronous>, transform_indices = @transform_5, window_bounds = array<i64: 32, 320>}, {pipeline_mode = #tpu.pipeline_mode<synchronous>, transform_indices = @transform_6, window_bounds = array<i64: 32, 1>}, {pipeline_mode = #tpu.pipeline_mode<synchronous>, transform_indices = @transform_7, window_bounds = array<i64: 8, 32>}, {pipeline_mode = #tpu.pipeline_mode<synchronous>, transform_indices = @transform_8, window_bounds = array<i64: 8, 1>}, {transform_indices = @transform_9, window_bounds = array<i64: 1, 8, 128>}]} {
    %c0 = arith.constant 0 : index
    %c0_0 = arith.constant 0 : index
    %c0_1 = arith.constant 0 : index
    %0 = vector.load %arg1[%c0, %c0_0, %c0_1] : memref<1x24x1280xbf16, #tpu.memory_space<vmem>>, vector<1x24x1280xbf16>
    %1 = vector.shape_cast %0 : vector<1x24x1280xbf16> to vector<24x1280xbf16>
    %c0_2 = arith.constant 0 : index
    %c0_3 = arith.constant 0 : index
    %2 = vector.load %arg2[%c0_2, %c0_3] : memref<32x24xbf16, #tpu.memory_space<vmem>>, vector<32x24xbf16>
    %cst = arith.constant dense<0.000000e+00> : vector<32x1280xf32>
    %3 = tpu.matmul %2, %1, %cst {dimension_numbers = #tpu.dot_dimension_numbers<[1], [0], [0], [1], [0, 0, 1, 1], [], []>} : vector<32x24xbf16>, vector<24x1280xbf16>, vector<32x1280xf32> -> vector<32x1280xf32>
    %c0_4 = arith.constant 0 : index
    %c0_5 = arith.constant 0 : index
    %4 = vector.load %arg3[%c0_4, %c0_5] : memref<32x1xf32, #tpu.memory_space<vmem>>, vector<32x1xf32>
    %5 = vector.broadcast %4 : vector<32x1xf32> to vector<32x1280xf32>
    %6 = arith.addf %3, %5 : vector<32x1280xf32>
    %cst_6 = arith.constant 0.000000e+00 : f32
    %7 = vector.broadcast %cst_6 : f32 to vector<32x1280xf32>
    %8 = arith.maximumf %6, %7 : vector<32x1280xf32>
    %9 = arith.truncf %8 : vector<32x1280xf32> to vector<32x1280xbf16>
    %10 = vector.extract_strided_slice %9 {offsets = [0, 0], sizes = [32, 128], strides = [1, 1]} : vector<32x1280xbf16> to vector<32x128xbf16>
    %11 = vector.extract_strided_slice %9 {offsets = [0, 1152], sizes = [32, 128], strides = [1, 1]} : vector<32x1280xbf16> to vector<32x128xbf16>
    %12 = tpu.concatenate %10, %10, %10, %10, %9, %11, %11, %11, %11 in 1 : vector<32x128xbf16>, vector<32x128xbf16>, vector<32x128xbf16>, vector<32x128xbf16>, vector<32x1280xbf16>, vector<32x128xbf16>, vector<32x128xbf16>, vector<32x128xbf16>, vector<32x128xbf16> -> vector<32x2304xbf16>
    %13 = vector.extract_strided_slice %12 {offsets = [0, 0], sizes = [32, 1280], strides = [1, 1]} : vector<32x2304xbf16> to vector<32x1280xbf16>
    %14 = vector.extract_strided_slice %12 {offsets = [0, 256], sizes = [32, 1280], strides = [1, 1]} : vector<32x2304xbf16> to vector<32x1280xbf16>
    %15 = vector.extract_strided_slice %12 {offsets = [0, 512], sizes = [32, 1280], strides = [1, 1]} : vector<32x2304xbf16> to vector<32x1280xbf16>
    %16 = vector.extract_strided_slice %12 {offsets = [0, 768], sizes = [32, 1280], strides = [1, 1]} : vector<32x2304xbf16> to vector<32x1280xbf16>
    %17 = vector.extract_strided_slice %12 {offsets = [0, 1024], sizes = [32, 1280], strides = [1, 1]} : vector<32x2304xbf16> to vector<32x1280xbf16>
    %18 = tpu.concatenate %13, %14, %15, %16, %17 in 0 : vector<32x1280xbf16>, vector<32x1280xbf16>, vector<32x1280xbf16>, vector<32x1280xbf16>, vector<32x1280xbf16> -> vector<160x1280xbf16>
    %c0_7 = arith.constant 0 : index
    %c0_8 = arith.constant 0 : index
    %c0_9 = arith.constant 0 : index
    %19 = vector.load %arg4[%c0_7, %c0_8, %c0_9] : memref<2x32x160xbf16, #tpu.memory_space<vmem>>, vector<1x32x160xbf16>
    %20 = vector.shape_cast %19 : vector<1x32x160xbf16> to vector<32x160xbf16>
    %cst_10 = arith.constant dense<0.000000e+00> : vector<32x1280xf32>
    %21 = tpu.matmul %20, %18, %cst_10 {dimension_numbers = #tpu.dot_dimension_numbers<[1], [0], [0], [1], [0, 0, 1, 1], [], []>} : vector<32x160xbf16>, vector<160x1280xbf16>, vector<32x1280xf32> -> vector<32x1280xf32>
    %c0_11 = arith.constant 0 : index
    %c0_12 = arith.constant 0 : index
    %c0_13 = arith.constant 0 : index
    %22 = vector.load %arg5[%c0_11, %c0_12, %c0_13] : memref<2x32x1xf32, #tpu.memory_space<vmem>>, vector<1x32x1xf32>
    %23 = vector.shape_cast %22 : vector<1x32x1xf32> to vector<32x1xf32>
    %24 = vector.broadcast %23 : vector<32x1xf32> to vector<32x1280xf32>
    %25 = arith.addf %21, %24 : vector<32x1280xf32>
    %cst_14 = arith.constant 0.000000e+00 : f32
    %26 = vector.broadcast %cst_14 : f32 to vector<32x1280xf32>
    %27 = arith.maximumf %25, %26 : vector<32x1280xf32>
    %28 = arith.addf %8, %27 : vector<32x1280xf32>
    %29 = arith.truncf %28 : vector<32x1280xf32> to vector<32x1280xbf16>
    %30 = vector.extract_strided_slice %29 {offsets = [0, 0], sizes = [32, 128], strides = [1, 1]} : vector<32x1280xbf16> to vector<32x128xbf16>
    %31 = vector.extract_strided_slice %29 {offsets = [0, 1152], sizes = [32, 128], strides = [1, 1]} : vector<32x1280xbf16> to vector<32x128xbf16>
    %32 = tpu.concatenate %30, %30, %30, %30, %29, %31, %31, %31, %31 in 1 : vector<32x128xbf16>, vector<32x128xbf16>, vector<32x128xbf16>, vector<32x128xbf16>, vector<32x1280xbf16>, vector<32x128xbf16>, vector<32x128xbf16>, vector<32x128xbf16>, vector<32x128xbf16> -> vector<32x2304xbf16>
    %33 = vector.extract_strided_slice %32 {offsets = [0, 0], sizes = [32, 1280], strides = [1, 1]} : vector<32x2304xbf16> to vector<32x1280xbf16>
    %34 = vector.extract_strided_slice %32 {offsets = [0, 256], sizes = [32, 1280], strides = [1, 1]} : vector<32x2304xbf16> to vector<32x1280xbf16>
    %35 = vector.extract_strided_slice %32 {offsets = [0, 512], sizes = [32, 1280], strides = [1, 1]} : vector<32x2304xbf16> to vector<32x1280xbf16>
    %36 = vector.extract_strided_slice %32 {offsets = [0, 768], sizes = [32, 1280], strides = [1, 1]} : vector<32x2304xbf16> to vector<32x1280xbf16>
    %37 = vector.extract_strided_slice %32 {offsets = [0, 1024], sizes = [32, 1280], strides = [1, 1]} : vector<32x2304xbf16> to vector<32x1280xbf16>
    %38 = tpu.concatenate %33, %34, %35, %36, %37 in 0 : vector<32x1280xbf16>, vector<32x1280xbf16>, vector<32x1280xbf16>, vector<32x1280xbf16>, vector<32x1280xbf16> -> vector<160x1280xbf16>
    %c1 = arith.constant 1 : index
    %c0_15 = arith.constant 0 : index
    %c0_16 = arith.constant 0 : index
    %39 = vector.load %arg4[%c1, %c0_15, %c0_16] : memref<2x32x160xbf16, #tpu.memory_space<vmem>>, vector<1x32x160xbf16>
    %40 = vector.shape_cast %39 : vector<1x32x160xbf16> to vector<32x160xbf16>
    %cst_17 = arith.constant dense<0.000000e+00> : vector<32x1280xf32>
    %41 = tpu.matmul %40, %38, %cst_17 {dimension_numbers = #tpu.dot_dimension_numbers<[1], [0], [0], [1], [0, 0, 1, 1], [], []>} : vector<32x160xbf16>, vector<160x1280xbf16>, vector<32x1280xf32> -> vector<32x1280xf32>
    %c1_18 = arith.constant 1 : index
    %c0_19 = arith.constant 0 : index
    %c0_20 = arith.constant 0 : index
    %42 = vector.load %arg5[%c1_18, %c0_19, %c0_20] : memref<2x32x1xf32, #tpu.memory_space<vmem>>, vector<1x32x1xf32>
    %43 = vector.shape_cast %42 : vector<1x32x1xf32> to vector<32x1xf32>
    %44 = vector.broadcast %43 : vector<32x1xf32> to vector<32x1280xf32>
    %45 = arith.addf %41, %44 : vector<32x1280xf32>
    %cst_21 = arith.constant 0.000000e+00 : f32
    %46 = vector.broadcast %cst_21 : f32 to vector<32x1280xf32>
    %47 = arith.maximumf %45, %46 : vector<32x1280xf32>
    %48 = arith.addf %28, %47 : vector<32x1280xf32>
    %49 = arith.truncf %48 : vector<32x1280xf32> to vector<32x1280xbf16>
    %50 = vector.extract_strided_slice %49 {offsets = [0, 0], sizes = [32, 128], strides = [1, 1]} : vector<32x1280xbf16> to vector<32x128xbf16>
    %51 = vector.extract_strided_slice %49 {offsets = [0, 128], sizes = [32, 128], strides = [1, 1]} : vector<32x1280xbf16> to vector<32x128xbf16>
    %52 = vector.extract_strided_slice %49 {offsets = [0, 256], sizes = [32, 128], strides = [1, 1]} : vector<32x1280xbf16> to vector<32x128xbf16>
    %53 = vector.extract_strided_slice %49 {offsets = [0, 384], sizes = [32, 128], strides = [1, 1]} : vector<32x1280xbf16> to vector<32x128xbf16>
    %54 = vector.extract_strided_slice %49 {offsets = [0, 512], sizes = [32, 128], strides = [1, 1]} : vector<32x1280xbf16> to vector<32x128xbf16>
    %55 = vector.extract_strided_slice %49 {offsets = [0, 640], sizes = [32, 128], strides = [1, 1]} : vector<32x1280xbf16> to vector<32x128xbf16>
    %56 = vector.extract_strided_slice %49 {offsets = [0, 768], sizes = [32, 128], strides = [1, 1]} : vector<32x1280xbf16> to vector<32x128xbf16>
    %57 = vector.extract_strided_slice %49 {offsets = [0, 896], sizes = [32, 128], strides = [1, 1]} : vector<32x1280xbf16> to vector<32x128xbf16>
    %58 = vector.extract_strided_slice %49 {offsets = [0, 1024], sizes = [32, 128], strides = [1, 1]} : vector<32x1280xbf16> to vector<32x128xbf16>
    %59 = vector.extract_strided_slice %49 {offsets = [0, 1152], sizes = [32, 128], strides = [1, 1]} : vector<32x1280xbf16> to vector<32x128xbf16>
    %60 = tpu.concatenate %50, %51, %52, %53, %54, %55, %56, %57, %58, %59 in 0 : vector<32x128xbf16>, vector<32x128xbf16>, vector<32x128xbf16>, vector<32x128xbf16>, vector<32x128xbf16>, vector<32x128xbf16>, vector<32x128xbf16>, vector<32x128xbf16>, vector<32x128xbf16>, vector<32x128xbf16> -> vector<320x128xbf16>
    %c0_22 = arith.constant 0 : index
    %c0_23 = arith.constant 0 : index
    %61 = vector.load %arg6[%c0_22, %c0_23] : memref<32x320xbf16, #tpu.memory_space<vmem>>, vector<32x320xbf16>
    %cst_24 = arith.constant dense<0.000000e+00> : vector<32x128xf32>
    %62 = tpu.matmul %61, %60, %cst_24 {dimension_numbers = #tpu.dot_dimension_numbers<[1], [0], [0], [1], [0, 0, 1, 1], [], []>} : vector<32x320xbf16>, vector<320x128xbf16>, vector<32x128xf32> -> vector<32x128xf32>
    %c0_25 = arith.constant 0 : index
    %c0_26 = arith.constant 0 : index
    %63 = vector.load %arg7[%c0_25, %c0_26] : memref<32x1xf32, #tpu.memory_space<vmem>>, vector<32x1xf32>
    %64 = vector.broadcast %63 : vector<32x1xf32> to vector<32x128xf32>
    %65 = arith.addf %62, %64 : vector<32x128xf32>
    %cst_27 = arith.constant 0.000000e+00 : f32
    %66 = vector.broadcast %cst_27 : f32 to vector<32x128xf32>
    %67 = arith.maximumf %65, %66 : vector<32x128xf32>
    %c0_28 = arith.constant 0 : index
    %c0_29 = arith.constant 0 : index
    %68 = vector.load %arg8[%c0_28, %c0_29] : memref<8x32xbf16, #tpu.memory_space<vmem>>, vector<8x32xbf16>
    %69 = arith.truncf %67 : vector<32x128xf32> to vector<32x128xbf16>
    %cst_30 = arith.constant dense<0.000000e+00> : vector<8x128xf32>
    %70 = tpu.matmul %68, %69, %cst_30 {dimension_numbers = #tpu.dot_dimension_numbers<[1], [0], [0], [1], [0, 0, 1, 1], [], []>} : vector<8x32xbf16>, vector<32x128xbf16>, vector<8x128xf32> -> vector<8x128xf32>
    %c0_31 = arith.constant 0 : index
    %c0_32 = arith.constant 0 : index
    %71 = vector.load %arg9[%c0_31, %c0_32] : memref<8x1xf32, #tpu.memory_space<vmem>>, vector<8x1xf32>
    %72 = vector.broadcast %71 : vector<8x1xf32> to vector<8x128xf32>
    %73 = arith.addf %70, %72 : vector<8x128xf32>
    %74 = arith.negf %73 : vector<8x128xf32>
    %75 = math.exp %74 : vector<8x128xf32>
    %cst_33 = arith.constant 1.000000e+00 : f32
    %76 = vector.broadcast %cst_33 : f32 to vector<8x128xf32>
    %77 = arith.addf %76, %75 : vector<8x128xf32>
    %78 = arith.divf %76, %77 : vector<8x128xf32>
    %c0_34 = arith.constant 0 : index
    %c0_35 = arith.constant 0 : index
    %c0_36 = arith.constant 0 : index
    %79 = vector.load %arg10[%c0_34, %c0_35, %c0_36] : memref<1x8x128xf32, #tpu.memory_space<vmem>>, vector<1x8x128xf32>
    %80 = vector.shape_cast %79 : vector<1x8x128xf32> to vector<8x128xf32>
    %81 = vector.shape_cast %78 : vector<8x128xf32> to vector<1x8x128xf32>
    tpu.vector_store %arg10[%c0_34, %c0_35, %c0_36], %81 {strides = array<i32>} : memref<1x8x128xf32, #tpu.memory_space<vmem>>, vector<1x8x128xf32>,
    return
  }
  func.func @transform_0(%arg0: i32) -> (i32, i32, i32) {
    %c0_i32 = arith.constant 0 : i32
    %c0_i32_0 = arith.constant 0 : i32
    %c0_i32_1 = arith.constant 0 : i32
    return %arg0, %c0_i32, %c0_i32_0 : i32, i32, i32
  }
  func.func @transform_1(%arg0: i32) -> (i32, i32) {
    %c0_i32 = arith.constant 0 : i32
    %c0_i32_0 = arith.constant 0 : i32
    %c0_i32_1 = arith.constant 0 : i32
    return %c0_i32, %c0_i32_0 : i32, i32
  }
  func.func @transform_2(%arg0: i32) -> (i32, i32) {
    %c0_i32 = arith.constant 0 : i32
    %c0_i32_0 = arith.constant 0 : i32
    %c0_i32_1 = arith.constant 0 : i32
    return %c0_i32, %c0_i32_0 : i32, i32
  }
  func.func @transform_3(%arg0: i32) -> (i32, i32, i32) {
    %c0_i32 = arith.constant 0 : i32
    %c0_i32_0 = arith.constant 0 : i32
    %c0_i32_1 = arith.constant 0 : i32
    %c0_i32_2 = arith.constant 0 : i32
    return %c0_i32, %c0_i32_0, %c0_i32_1 : i32, i32, i32
  }
  func.func @transform_4(%arg0: i32) -> (i32, i32, i32) {
    %c0_i32 = arith.constant 0 : i32
    %c0_i32_0 = arith.constant 0 : i32
    %c0_i32_1 = arith.constant 0 : i32
    %c0_i32_2 = arith.constant 0 : i32
    return %c0_i32, %c0_i32_0, %c0_i32_1 : i32, i32, i32
  }
  func.func @transform_5(%arg0: i32) -> (i32, i32) {
    %c0_i32 = arith.constant 0 : i32
    %c0_i32_0 = arith.constant 0 : i32
    %c0_i32_1 = arith.constant 0 : i32
    return %c0_i32, %c0_i32_0 : i32, i32
  }
  func.func @transform_6(%arg0: i32) -> (i32, i32) {
    %c0_i32 = arith.constant 0 : i32
    %c0_i32_0 = arith.constant 0 : i32
    %c0_i32_1 = arith.constant 0 : i32
    return %c0_i32, %c0_i32_0 : i32, i32
  }
  func.func @transform_7(%arg0: i32) -> (i32, i32) {
    %c0_i32 = arith.constant 0 : i32
    %c0_i32_0 = arith.constant 0 : i32
    %c0_i32_1 = arith.constant 0 : i32
    return %c0_i32, %c0_i32_0 : i32, i32
  }
  func.func @transform_8(%arg0: i32) -> (i32, i32) {
    %c0_i32 = arith.constant 0 : i32
    %c0_i32_0 = arith.constant 0 : i32
    %c0_i32_1 = arith.constant 0 : i32
    return %c0_i32, %c0_i32_0 : i32, i32
  }
  func.func @transform_9(%arg0: i32) -> (i32, i32, i32) {
    %c0_i32 = arith.constant 0 : i32
    %c0_i32_0 = arith.constant 0 : i32
    %c0_i32_1 = arith.constant 0 : i32
    return %arg0, %c0_i32, %c0_i32_0 : i32, i32, i32
  }
}

</mosaic_0001>

<llo_original>
// kernel: tpu_custom_call.1
$region0: #{tpu_custom_call.1}
  #allocation0 [shape = 'u32[]', space=smem, size = 0x4, offset = 0x4, fixed_abs, tag = 'smem constant byte address 0x4 - core index']
  #allocation1 [shape = 'u32[144,128]{1,0:T(1,128)}', space=vmem, size = 0x12000, scoped, tag = 'internal scratch']
  %s0 = inlined_call_operand.vmem [shape: bf16[1,24,1280], index: 0, kind: input, shape index: {}]
  %s1 = inlined_call_operand.vmem [shape: bf16[32,24], index: 1, kind: input, shape index: {}]
  %s2 = inlined_call_operand.vmem [shape: f32[32,1], index: 2, kind: input, shape index: {}]
  %s3 = inlined_call_operand.hbm [shape: bf16[2,32,160], index: 3, kind: input, shape index: {}]
  %s4 = inlined_call_operand.vmem [shape: f32[2,32,1], index: 4, kind: input, shape index: {}]
  %s5 = inlined_call_operand.vmem [shape: bf16[32,320], index: 5, kind: input, shape index: {}]
  %s6 = inlined_call_operand.vmem [shape: f32[32,1], index: 6, kind: input, shape index: {}]
  %s7 = inlined_call_operand.vmem [shape: bf16[8,32], index: 7, kind: input, shape index: {}]
  %s8 = inlined_call_operand.vmem [shape: f32[8,1], index: 8, kind: input, shape index: {}]
  %s9 = inlined_call_operand.hbm [shape: f32[1,8,128], index: 9, kind: output, shape index: {}]
  %s10 = sld [smem:[#allocation0]]
  $region50: #{tpu_custom_call.1} parent=0
    _
  %s12 = ssub.s32 1, %s10
  %s13 = scalar_select 0, %s12, %s10
  $region1: #{tpu_custom_call.1} parent=0
    #allocation2 [shape = 'u8[32768]{0}', space=vmem, size = 0x8000, scoped, tag = 'input window, operand 3, single buffered']
    #allocation3 [shape = 's32[1]{0}', space=sflag, size = 0x4, scoped, tag = 'scoped memory for tpu_custom_call.1']
    #allocation4 [shape = 's32[1]{0}', space=sflag, size = 0x4, scoped, tag = 'scoped memory for tpu_custom_call.1']
    #allocation5 [shape = 'u8[4096]{0}', space=vmem, size = 0x1000, scoped, tag = 'output window, operand 0, single buffered']
    %14 = vsyncpa [#allocation3], 0
    %15 = vsyncpa [#allocation4], 0
    // Predicated region
    $region2: #{tpu_custom_call.1} parent=1 // pred_check
      _
    $region3: #{tpu_custom_call.1} parent=1 // pred_check_branch
      %17 = sbr.rel (0) target = $region5
    $region4: #{tpu_custom_call.1} parent=1 // pred_region
      _
    $region5: #{tpu_custom_call.1} parent=1 // pred_fallthru
      _
    // Predicated region
    $region6: #{tpu_custom_call.1} parent=1 // pred_check
      _
    $region7: #{tpu_custom_call.1} parent=1 // pred_check_branch
      %19 = sbr.rel (0) target = $region9
    $region8: #{tpu_custom_call.1} parent=1 // pred_region
      _
    $region9: #{tpu_custom_call.1} parent=1 // pred_fallthru
      _
    // Predicated region
    $region10: #{tpu_custom_call.1} parent=1 // pred_check
      _
    $region11: #{tpu_custom_call.1} parent=1 // pred_check_branch
      %21 = sbr.rel (0) target = $region13
    $region12: #{tpu_custom_call.1} parent=1 // pred_region
      _
    $region13: #{tpu_custom_call.1} parent=1 // pred_fallthru
      _
    // Predicated region
    $region14: #{tpu_custom_call.1} parent=1 // pred_check
      _
    $region15: #{tpu_custom_call.1} parent=1 // pred_check_branch
      %23 = sbr.rel (0) target = $region17
    $region16: #{tpu_custom_call.1} parent=1 // pred_region
      %s25 = ssub.s32 1024, 1024
      %26 = vsyncadd [#allocation3], %s25
      %s27 = sshll.u32 [#allocation2], 4
      %s28 = int_to_ptr.vmem [resolvable:$true] %s27
      %33 = dma.hbm_to_vmem [thread:$0]  %s3, 1024, %s28, [#allocation3], 128, 128, 8
    $region17: #{tpu_custom_call.1} parent=1 // pred_fallthru
      _
    // Predicated region
    $region18: #{tpu_custom_call.1} parent=1 // pred_check
      _
    $region19: #{tpu_custom_call.1} parent=1 // pred_check_branch
      %35 = sbr.rel (0) target = $region21
    $region20: #{tpu_custom_call.1} parent=1 // pred_region
      _
    $region21: #{tpu_custom_call.1} parent=1 // pred_fallthru
      _
    // Predicated region
    $region22: #{tpu_custom_call.1} parent=1 // pred_check
      _
    $region23: #{tpu_custom_call.1} parent=1 // pred_check_branch
      %37 = sbr.rel (0) target = $region25
    $region24: #{tpu_custom_call.1} parent=1 // pred_region
      _
    $region25: #{tpu_custom_call.1} parent=1 // pred_fallthru
      _
    // Predicated region
    $region26: #{tpu_custom_call.1} parent=1 // pred_check
      _
    $region27: #{tpu_custom_call.1} parent=1 // pred_check_branch
      %39 = sbr.rel (0) target = $region29
    $region28: #{tpu_custom_call.1} parent=1 // pred_region
      _
    $region29: #{tpu_custom_call.1} parent=1 // pred_fallthru
      _
    // Predicated region
    $region30: #{tpu_custom_call.1} parent=1 // pred_check
      _
    $region31: #{tpu_custom_call.1} parent=1 // pred_check_branch
      %41 = sbr.rel (0) target = $region33
    $region32: #{tpu_custom_call.1} parent=1 // pred_region
      _
    $region33: #{tpu_custom_call.1} parent=1 // pred_fallthru
      _
    // Predicated region
    $region34: #{tpu_custom_call.1} parent=1 // pred_check
      _
    $region35: #{tpu_custom_call.1} parent=1 // pred_check_branch
      %43 = sbr.rel (0) target = $region37
    $region36: #{tpu_custom_call.1} parent=1 // pred_region
      _
    $region37: #{tpu_custom_call.1} parent=1 // pred_fallthru
      _
    // Predicated region
    $region38: #{tpu_custom_call.1} parent=1 // pred_check
      _
    $region39: #{tpu_custom_call.1} parent=1 // pred_check_branch
      %45 = sbr.rel (0) target = $region41
    $region40: #{tpu_custom_call.1} parent=1 // pred_region
      %46 = dma.done [#allocation3], 1024
    $region41: #{tpu_custom_call.1} parent=1 // pred_fallthru
      _
    %v48 = vld [vmem:[%s0] sm:$0xff]
    %v49 = vld [vmem:[%s0 + $0x8] sm:$0xff]
    %v50 = vld [vmem:[%s0 + $0x10] sm:$0xff]
    %v51 = vld [vmem:[%s0 + $0x18] sm:$0xff]
    %v52 = vld [vmem:[%s0 + $0x20] sm:$0xff]
    %v53 = vld [vmem:[%s0 + $0x28] sm:$0xff]
    %v54 = vld [vmem:[%s0 + $0x30] sm:$0xff]
    %v55 = vld [vmem:[%s0 + $0x38] sm:$0xff]
    %v56 = vld [vmem:[%s0 + $0x40] sm:$0xff]
    %v57 = vld [vmem:[%s0 + $0x48] sm:$0xff]
    %v58 = vld [vmem:[%s0 + $0x50] sm:$0xff]
    %v59 = vld [vmem:[%s0 + $0x58] sm:$0xff]
    %v60 = vld [vmem:[%s0 + $0x60] sm:$0xff]
    %v61 = vld [vmem:[%s0 + $0x68] sm:$0xff]
    %v62 = vld [vmem:[%s0 + $0x70] sm:$0xff]
    %v63 = vld [vmem:[%s1] sm:$0xf]
    %v64 = vld [vmem:[%s1 + $0x4] sm:$0xf]
    %v65 = vld [vmem:[%s1 + $0x8] sm:$0xf]
    %v66 = vld [vmem:[%s1 + $0xc] sm:$0xf]
    %v67 = vld [vmem:[%s2] sm:$0xff]
    %v68 = vld [vmem:[%s2 + $0x8] sm:$0xff]
    %v69 = vld [vmem:[%s2 + $0x10] sm:$0xff]
    %v70 = vld [vmem:[%s2 + $0x18] sm:$0xff]
    %72 = vset.pattern.permute.xlu0 0
    %73 = vperm.xlu0 %72, %v67
    %v74 = vpop.permute.xlu0 %73
    %77 = vset.pattern.permute.xlu0 0
    %78 = vperm.xlu0 %77, %v68
    %v79 = vpop.permute.xlu0 %78
    %82 = vset.pattern.permute.xlu0 0
    %83 = vperm.xlu0 %82, %v69
    %v84 = vpop.permute.xlu0 %83
    %87 = vset.pattern.permute.xlu0 0
    %88 = vperm.xlu0 %87, %v70
    %v89 = vpop.permute.xlu0 %88
    %v95 = vunpack.c.l.b16 %v63
    %v96 = vunpack.c.l.b16 %v64
    %v97 = vunpack.c.l.b16 %v65
    %v98 = vunpack.c.l.b16 %v66
    %v99 = vpack.c.b16 %v96, %v95
    %v100 = vpack.c.b16 %v98, %v97
    %v116 = vunpack.c.l.b16 %v48
    %v117 = vunpack.c.h.b16 %v48
    %v118 = vunpack.c.l.b16 %v49
    %v119 = vunpack.c.h.b16 %v49
    %v120 = vunpack.c.l.b16 %v50
    %v121 = vunpack.c.h.b16 %v50
    %v122 = vunpack.c.l.b16 %v51
    %v123 = vunpack.c.h.b16 %v51
    %v124 = vunpack.c.l.b16 %v52
    %v125 = vunpack.c.h.b16 %v52
    %v126 = vunpack.c.l.b16 %v53
    %v127 = vunpack.c.h.b16 %v53
    %v128 = vunpack.c.l.b16 %v54
    %v129 = vunpack.c.h.b16 %v54
    %v130 = vunpack.c.l.b16 %v55
    %v131 = vunpack.c.h.b16 %v55
    %v132 = vunpack.c.l.b16 %v56
    %v133 = vunpack.c.h.b16 %v56
    %v134 = vunpack.c.l.b16 %v57
    %v135 = vunpack.c.h.b16 %v57
    %v136 = vunpack.c.l.b16 %v58
    %v137 = vunpack.c.h.b16 %v58
    %v138 = vunpack.c.l.b16 %v59
    %v139 = vunpack.c.h.b16 %v59
    %v140 = vunpack.c.l.b16 %v60
    %v141 = vunpack.c.h.b16 %v60
    %v142 = vunpack.c.l.b16 %v61
    %v143 = vunpack.c.h.b16 %v61
    %v144 = vunpack.c.l.b16 %v62
    %v145 = vunpack.c.h.b16 %v62
    %v146 = vpack.c.b16 %v126, %v116
    %v147 = vpack.c.b16 %v127, %v117
    %v148 = vpack.c.b16 %v128, %v118
    %v149 = vpack.c.b16 %v129, %v119
    %v150 = vpack.c.b16 %v130, %v120
    %v151 = vpack.c.b16 %v131, %v121
    %v152 = vpack.c.b16 %v132, %v122
    %v153 = vpack.c.b16 %v133, %v123
    %v154 = vpack.c.b16 %v134, %v124
    %v155 = vpack.c.b16 %v135, %v125
    %v156 = vpack.c.b16 %v136, %v136
    %v157 = vpack.c.b16 %v137, %v137
    %v158 = vpack.c.b16 %v138, %v138
    %v159 = vpack.c.b16 %v139, %v139
    %v160 = vpack.c.b16 %v140, %v140
    %v161 = vpack.c.b16 %v141, %v141
    %v162 = vpack.c.b16 %v142, %v142
    %v163 = vpack.c.b16 %v143, %v143
    %v164 = vpack.c.b16 %v144, %v144
    %v165 = vpack.c.b16 %v145, %v145
    %vm176 = vcmask 195584
    %v178 = vsel %vm176, %v99, 0
    %v181 = vsel %vm176, %v100, 0
    %vm183 = vcmask 1043456
    %v185 = vsel %vm183, %v156, 0
    %v188 = vsel %vm183, %v157, 0
    %v191 = vsel %vm183, %v158, 0
    %v194 = vsel %vm183, %v159, 0
    %v197 = vsel %vm183, %v160, 0
    %v200 = vsel %vm183, %v161, 0
    %v203 = vsel %vm183, %v162, 0
    %v206 = vsel %vm183, %v163, 0
    %v209 = vsel %vm183, %v164, 0
    %v212 = vsel %vm183, %v165, 0
    %214 = vmatprep.subr.bf16.mxu0 %v147
    %215 = vmatpush1.bf16.msra.mxu0 %v146
    %216 = vmatprep.subr.bf16.mxu0 %v188
    %217 = vmatpush1.bf16.msra.mxu0 %v185
    %218 = vmatprep.subr.bf16.mxu0 0
    %219 = vmatpush1.bf16.msra.mxu0 0
    %220 = vmatprep.subr.bf16.mxu0 0
    %221 = vmatpush1.bf16.msra.mxu0 0
    %222 = vmatprep.subr.bf16.mxu0 0
    %223 = vmatpush1.bf16.msra.mxu0 0
    %224 = vmatprep.subr.bf16.mxu0 0
    %225 = vmatpush1.bf16.msra.mxu0 0
    %226 = vmatprep.subr.bf16.mxu0 0
    %227 = vmatpush1.bf16.msra.mxu0 0
    %228 = vmatprep.subr.bf16.mxu0 0
    %229 = vmatpush1.bf16.msra.mxu0 0
    %230 = vmatprep.subr.bf16.mxu0 0
    %231 = vmatpush1.bf16.msra.mxu0 0
    %232 = vmatprep.subr.bf16.mxu0 0
    %233 = vmatpush1.bf16.msra.mxu0 0
    %234 = vmatprep.subr.bf16.mxu0 0
    %235 = vmatpush1.bf16.msra.mxu0 0
    %236 = vmatprep.subr.bf16.mxu0 0
    %237 = vmatpush1.bf16.msra.mxu0 0
    %238 = vmatprep.subr.bf16.mxu0 0
    %239 = vmatpush1.bf16.msra.mxu0 0
    %240 = vmatprep.subr.bf16.mxu0 0
    %241 = vmatpush1.bf16.msra.mxu0 0
    %242 = vmatprep.subr.bf16.mxu0 0
    %243 = vmatpush1.bf16.msra.mxu0 0
    %244 = vmatprep.subr.bf16.mxu0 0
    %245 = vmatpush1.bf16.msra.mxu0 0
    %246 = vmatprep.mubr.bf16.mxu0 0
    %247 = vmatmul.mubr.bf16.gmra.mrb[0].mxu0 %v178
    %v248 = vpop.f32.mrb[0].mxu0
    %v249 = vadd.f32 %v74, %v248
    %v250 = vpop.f32.mrb[0].mxu0
    %v251 = vadd.f32 %v74, %v250
    %v252 = vpop.f32.mrb[0].mxu0
    %v253 = vadd.f32 %v79, %v252
    %v254 = vpop.f32.mrb[0].mxu0
    %v255 = vadd.f32 %v79, %v254
    %256 = vmatprep.mubr.bf16.mxu0 0
    %257 = vmatmul.mubr.bf16.gmra.mrb[0].mxu0 %v181
    %v258 = vpop.f32.mrb[0].mxu0
    %v259 = vadd.f32 %v84, %v258
    %v260 = vpop.f32.mrb[0].mxu0
    %v261 = vadd.f32 %v84, %v260
    %v262 = vpop.f32.mrb[0].mxu0
    %v263 = vadd.f32 %v89, %v262
    %v264 = vpop.f32.mrb[0].mxu0
    %v265 = vadd.f32 %v89, %v264
    %266 = vdwg.mxu0
    %267 = vmatprep.subr.bf16.mxu0 %v149
    %268 = vmatpush1.bf16.msra.mxu0 %v148
    %269 = vmatprep.subr.bf16.mxu0 %v194
    %270 = vmatpush1.bf16.msra.mxu0 %v191
    %271 = vmatprep.subr.bf16.mxu0 0
    %272 = vmatpush1.bf16.msra.mxu0 0
    %273 = vmatprep.subr.bf16.mxu0 0
    %274 = vmatpush1.bf16.msra.mxu0 0
    %275 = vmatprep.subr.bf16.mxu0 0
    %276 = vmatpush1.bf16.msra.mxu0 0
    %277 = vmatprep.subr.bf16.mxu0 0
    %278 = vmatpush1.bf16.msra.mxu0 0
    %279 = vmatprep.subr.bf16.mxu0 0
    %280 = vmatpush1.bf16.msra.mxu0 0
    %281 = vmatprep.subr.bf16.mxu0 0
    %282 = vmatpush1.bf16.msra.mxu0 0
    %283 = vmatprep.subr.bf16.mxu0 0
    %284 = vmatpush1.bf16.msra.mxu0 0
    %285 = vmatprep.subr.bf16.mxu0 0
    %286 = vmatpush1.bf16.msra.mxu0 0
    %287 = vmatprep.subr.bf16.mxu0 0
    %288 = vmatpush1.bf16.msra.mxu0 0
    %289 = vmatprep.subr.bf16.mxu0 0
    %290 = vmatpush1.bf16.msra.mxu0 0
    %291 = vmatprep.subr.bf16.mxu0 0
    %292 = vmatpush1.bf16.msra.mxu0 0
    %293 = vmatprep.subr.bf16.mxu0 0
    %294 = vmatpush1.bf16.msra.mxu0 0
    %295 = vmatprep.subr.bf16.mxu0 0
    %296 = vmatpush1.bf16.msra.mxu0 0
    %297 = vmatprep.subr.bf16.mxu0 0
    %298 = vmatpush1.bf16.msra.mxu0 0
    %299 = vmatprep.mubr.bf16.mxu0 0
    %300 = vmatmul.mubr.bf16.gmra.mrb[0].mxu0 %v178
    %v301 = vpop.f32.mrb[0].mxu0
    %v302 = vadd.f32 %v74, %v301
    %v303 = vpop.f32.mrb[0].mxu0
    %v304 = vadd.f32 %v74, %v303
    %v305 = vpop.f32.mrb[0].mxu0
    %v306 = vadd.f32 %v79, %v305
    %v307 = vpop.f32.mrb[0].mxu0
    %v308 = vadd.f32 %v79, %v307
    %309 = vmatprep.mubr.bf16.mxu0 0
    %310 = vmatmul.mubr.bf16.gmra.mrb[0].mxu0 %v181
    %v311 = vpop.f32.mrb[0].mxu0
    %v312 = vadd.f32 %v84, %v311
    %v313 = vpop.f32.mrb[0].mxu0
    %v314 = vadd.f32 %v84, %v313
    %v315 = vpop.f32.mrb[0].mxu0
    %v316 = vadd.f32 %v89, %v315
    %v317 = vpop.f32.mrb[0].mxu0
    %v318 = vadd.f32 %v89, %v317
    %319 = vdwg.mxu0
    %320 = vmatprep.subr.bf16.mxu0 %v151
    %321 = vmatpush1.bf16.msra.mxu0 %v150
    %322 = vmatprep.subr.bf16.mxu0 %v200
    %323 = vmatpush1.bf16.msra.mxu0 %v197
    %324 = vmatprep.subr.bf16.mxu0 0
    %325 = vmatpush1.bf16.msra.mxu0 0
    %326 = vmatprep.subr.bf16.mxu0 0
    %327 = vmatpush1.bf16.msra.mxu0 0
    %328 = vmatprep.subr.bf16.mxu0 0
    %329 = vmatpush1.bf16.msra.mxu0 0
    %330 = vmatprep.subr.bf16.mxu0 0
    %331 = vmatpush1.bf16.msra.mxu0 0
    %332 = vmatprep.subr.bf16.mxu0 0
    %333 = vmatpush1.bf16.msra.mxu0 0
    %334 = vmatprep.subr.bf16.mxu0 0
    %335 = vmatpush1.bf16.msra.mxu0 0
    %336 = vmatprep.subr.bf16.mxu0 0
    %337 = vmatpush1.bf16.msra.mxu0 0
    %338 = vmatprep.subr.bf16.mxu0 0
    %339 = vmatpush1.bf16.msra.mxu0 0
    %340 = vmatprep.subr.bf16.mxu0 0
    %341 = vmatpush1.bf16.msra.mxu0 0
    %342 = vmatprep.subr.bf16.mxu0 0
    %343 = vmatpush1.bf16.msra.mxu0 0
    %344 = vmatprep.subr.bf16.mxu0 0
    %345 = vmatpush1.bf16.msra.mxu0 0
    %346 = vmatprep.subr.bf16.mxu0 0
    %347 = vmatpush1.bf16.msra.mxu0 0
    %348 = vmatprep.subr.bf16.mxu0 0
    %349 = vmatpush1.bf16.msra.mxu0 0
    %350 = vmatprep.subr.bf16.mxu0 0
    %351 = vmatpush1.bf16.msra.mxu0 0
    %352 = vmatprep.mubr.bf16.mxu0 0
    %353 = vmatmul.mubr.bf16.gmra.mrb[0].mxu0 %v178
    %v354 = vpop.f32.mrb[0].mxu0
    %v355 = vadd.f32 %v74, %v354
    %v356 = vpop.f32.mrb[0].mxu0
    %v357 = vadd.f32 %v74, %v356
    %v358 = vpop.f32.mrb[0].mxu0
    %v359 = vadd.f32 %v79, %v358
    %v360 = vpop.f32.mrb[0].mxu0
    %v361 = vadd.f32 %v79, %v360
    %362 = vmatprep.mubr.bf16.mxu0 0
    %363 = vmatmul.mubr.bf16.gmra.mrb[0].mxu0 %v181
    %v364 = vpop.f32.mrb[0].mxu0
    %v365 = vadd.f32 %v84, %v364
    %v366 = vpop.f32.mrb[0].mxu0
    %v367 = vadd.f32 %v84, %v366
    %v368 = vpop.f32.mrb[0].mxu0
    %v369 = vadd.f32 %v89, %v368
    %v370 = vpop.f32.mrb[0].mxu0
    %v371 = vadd.f32 %v89, %v370
    %372 = vdwg.mxu0
    %373 = vmatprep.subr.bf16.mxu0 %v153
    %374 = vmatpush1.bf16.msra.mxu0 %v152
    %375 = vmatprep.subr.bf16.mxu0 %v206
    %376 = vmatpush1.bf16.msra.mxu0 %v203
    %377 = vmatprep.subr.bf16.mxu0 0
    %378 = vmatpush1.bf16.msra.mxu0 0
    %379 = vmatprep.subr.bf16.mxu0 0
    %380 = vmatpush1.bf16.msra.mxu0 0
    %381 = vmatprep.subr.bf16.mxu0 0
    %382 = vmatpush1.bf16.msra.mxu0 0
    %383 = vmatprep.subr.bf16.mxu0 0
    %384 = vmatpush1.bf16.msra.mxu0 0
    %385 = vmatprep.subr.bf16.mxu0 0
    %386 = vmatpush1.bf16.msra.mxu0 0
    %387 = vmatprep.subr.bf16.mxu0 0
    %388 = vmatpush1.bf16.msra.mxu0 0
    %389 = vmatprep.subr.bf16.mxu0 0
    %390 = vmatpush1.bf16.msra.mxu0 0
    %391 = vmatprep.subr.bf16.mxu0 0
    %392 = vmatpush1.bf16.msra.mxu0 0
    %393 = vmatprep.subr.bf16.mxu0 0
    %394 = vmatpush1.bf16.msra.mxu0 0
    %395 = vmatprep.subr.bf16.mxu0 0
    %396 = vmatpush1.bf16.msra.mxu0 0
    %397 = vmatprep.subr.bf16.mxu0 0
    %398 = vmatpush1.bf16.msra.mxu0 0
    %399 = vmatprep.subr.bf16.mxu0 0
    %400 = vmatpush1.bf16.msra.mxu0 0
    %401 = vmatprep.subr.bf16.mxu0 0
    %402 = vmatpush1.bf16.msra.mxu0 0
    %403 = vmatprep.subr.bf16.mxu0 0
    %404 = vmatpush1.bf16.msra.mxu0 0
    %405 = vmatprep.mubr.bf16.mxu0 0
    %406 = vmatmul.mubr.bf16.gmra.mrb[0].mxu0 %v178
    %v407 = vpop.f32.mrb[0].mxu0
    %v408 = vadd.f32 %v74, %v407
    %v409 = vpop.f32.mrb[0].mxu0
    %v410 = vadd.f32 %v74, %v409
    %v411 = vpop.f32.mrb[0].mxu0
    %v412 = vadd.f32 %v79, %v411
    %v413 = vpop.f32.mrb[0].mxu0
    %v414 = vadd.f32 %v79, %v413
    %415 = vmatprep.mubr.bf16.mxu0 0
    %416 = vmatmul.mubr.bf16.gmra.mrb[0].mxu0 %v181
    %v417 = vpop.f32.mrb[0].mxu0
    %v418 = vadd.f32 %v84, %v417
    %v419 = vpop.f32.mrb[0].mxu0
    %v420 = vadd.f32 %v84, %v419
    %v421 = vpop.f32.mrb[0].mxu0
    %v422 = vadd.f32 %v89, %v421
    %v423 = vpop.f32.mrb[0].mxu0
    %v424 = vadd.f32 %v89, %v423
    %425 = vdwg.mxu0
    %426 = vmatprep.subr.bf16.mxu0 %v155
    %427 = vmatpush1.bf16.msra.mxu0 %v154
    %428 = vmatprep.subr.bf16.mxu0 %v212
    %429 = vmatpush1.bf16.msra.mxu0 %v209
    %430 = vmatprep.subr.bf16.mxu0 0
    %431 = vmatpush1.bf16.msra.mxu0 0
    %432 = vmatprep.subr.bf16.mxu0 0
    %433 = vmatpush1.bf16.msra.mxu0 0
    %434 = vmatprep.subr.bf16.mxu0 0
    %435 = vmatpush1.bf16.msra.mxu0 0
    %436 = vmatprep.subr.bf16.mxu0 0
    %437 = vmatpush1.bf16.msra.mxu0 0
    %438 = vmatprep.subr.bf16.mxu0 0
    %439 = vmatpush1.bf16.msra.mxu0 0
    %440 = vmatprep.subr.bf16.mxu0 0
    %441 = vmatpush1.bf16.msra.mxu0 0
    %442 = vmatprep.subr.bf16.mxu0 0
    %443 = vmatpush1.bf16.msra.mxu0 0
    %444 = vmatprep.subr.bf16.mxu0 0
    %445 = vmatpush1.bf16.msra.mxu0 0
    %446 = vmatprep.subr.bf16.mxu0 0
    %447 = vmatpush1.bf16.msra.mxu0 0
    %448 = vmatprep.subr.bf16.mxu0 0
    %449 = vmatpush1.bf16.msra.mxu0 0
    %450 = vmatprep.subr.bf16.mxu0 0
    %451 = vmatpush1.bf16.msra.mxu0 0
    %452 = vmatprep.subr.bf16.mxu0 0
    %453 = vmatpush1.bf16.msra.mxu0 0
    %454 = vmatprep.subr.bf16.mxu0 0
    %455 = vmatpush1.bf16.msra.mxu0 0
    %456 = vmatprep.subr.bf16.mxu0 0
    %457 = vmatpush1.bf16.msra.mxu0 0
    %458 = vmatprep.mubr.bf16.mxu0 0
    %459 = vmatmul.mubr.bf16.gmra.mrb[0].mxu0 %v178
    %v460 = vpop.f32.mrb[0].mxu0
    %v461 = vadd.f32 %v74, %v460
    %v462 = vpop.f32.mrb[0].mxu0
    %v463 = vadd.f32 %v74, %v462
    %v464 = vpop.f32.mrb[0].mxu0
    %v465 = vadd.f32 %v79, %v464
    %v466 = vpop.f32.mrb[0].mxu0
    %v467 = vadd.f32 %v79, %v466
    %468 = vmatprep.mubr.bf16.mxu0 0
    %469 = vmatmul.mubr.bf16.gmra.mrb[0].mxu0 %v181
    %v470 = vpop.f32.mrb[0].mxu0
    %v471 = vadd.f32 %v84, %v470
    %v472 = vpop.f32.mrb[0].mxu0
    %v473 = vadd.f32 %v84, %v472
    %v474 = vpop.f32.mrb[0].mxu0
    %v475 = vadd.f32 %v89, %v474
    %v476 = vpop.f32.mrb[0].mxu0
    %v477 = vadd.f32 %v89, %v476
    %478 = vdwg.mxu0
    %v479 = vmax.f32 %v249, 0.0
    %v480 = vmax.f32 %v251, 0.0
    %v481 = vmax.f32 %v302, 0.0
    %v482 = vmax.f32 %v304, 0.0
    %v483 = vmax.f32 %v355, 0.0
    %v484 = vmax.f32 %v357, 0.0
    %v485 = vmax.f32 %v408, 0.0
    %v486 = vmax.f32 %v410, 0.0
    %v487 = vmax.f32 %v461, 0.0
    %v488 = vmax.f32 %v463, 0.0
    %v489 = vmax.f32 %v253, 0.0
    %v490 = vmax.f32 %v255, 0.0
    %v491 = vmax.f32 %v306, 0.0
    %v492 = vmax.f32 %v308, 0.0
    %v493 = vmax.f32 %v359, 0.0
    %v494 = vmax.f32 %v361, 0.0
    %v495 = vmax.f32 %v412, 0.0
    %v496 = vmax.f32 %v414, 0.0
    %v497 = vmax.f32 %v465, 0.0
    %v498 = vmax.f32 %v467, 0.0
    %v499 = vmax.f32 %v259, 0.0
    %v500 = vmax.f32 %v261, 0.0
    %v501 = vmax.f32 %v312, 0.0
    %v502 = vmax.f32 %v314, 0.0
    %v503 = vmax.f32 %v365, 0.0
    %v504 = vmax.f32 %v367, 0.0
    %v505 = vmax.f32 %v418, 0.0
    %v506 = vmax.f32 %v420, 0.0
    %v507 = vmax.f32 %v471, 0.0
    %v508 = vmax.f32 %v473, 0.0
    %v509 = vmax.f32 %v263, 0.0
    %v510 = vmax.f32 %v265, 0.0
    %v511 = vmax.f32 %v316, 0.0
    %v512 = vmax.f32 %v318, 0.0
    %v513 = vmax.f32 %v369, 0.0
    %v514 = vmax.f32 %v371, 0.0
    %v515 = vmax.f32 %v422, 0.0
    %v516 = vmax.f32 %v424, 0.0
    %v517 = vmax.f32 %v475, 0.0
    %v518 = vmax.f32 %v477, 0.0
    %v519 = vpack.c.bf16 %v489, %v479
    %v520 = vpack.c.bf16 %v490, %v480
    %v521 = vpack.c.bf16 %v491, %v481
    %v522 = vpack.c.bf16 %v492, %v482
    %v523 = vpack.c.bf16 %v493, %v483
    %v524 = vpack.c.bf16 %v494, %v484
    %v525 = vpack.c.bf16 %v495, %v485
    %v526 = vpack.c.bf16 %v496, %v486
    %v527 = vpack.c.bf16 %v497, %v487
    %v528 = vpack.c.bf16 %v498, %v488
    %v529 = vpack.c.bf16 %v509, %v499
    %v530 = vpack.c.bf16 %v510, %v500
    %v531 = vpack.c.bf16 %v511, %v501
    %v532 = vpack.c.bf16 %v512, %v502
    %v533 = vpack.c.bf16 %v513, %v503
    %v534 = vpack.c.bf16 %v514, %v504
    %v535 = vpack.c.bf16 %v515, %v505
    %v536 = vpack.c.bf16 %v516, %v506
    %v537 = vpack.c.bf16 %v517, %v507
    %v538 = vpack.c.bf16 %v518, %v508
    %v539 = vld [vmem:[#allocation2] sm:$0xff]
    %v540 = vld [vmem:[#allocation2 + $0x8] sm:$0xff]
    %v541 = vld [vmem:[#allocation2 + $0x10] sm:$0xff]
    %v542 = vld [vmem:[#allocation2 + $0x18] sm:$0xff]
    %v543 = vld [vmem:[%s4] sm:$0xff]
    %v544 = vld [vmem:[%s4 + $0x8] sm:$0xff]
    %v545 = vld [vmem:[%s4 + $0x10] sm:$0xff]
    %v546 = vld [vmem:[%s4 + $0x18] sm:$0xff]
    %548 = vset.pattern.permute.xlu0 0
    %549 = vperm.xlu0 %548, %v543
    %v550 = vpop.permute.xlu0 %549
    %553 = vset.pattern.permute.xlu0 0
    %554 = vperm.xlu0 %553, %v544
    %v555 = vpop.permute.xlu0 %554
    %558 = vset.pattern.permute.xlu0 0
    %559 = vperm.xlu0 %558, %v545
    %v560 = vpop.permute.xlu0 %559
    %563 = vset.pattern.permute.xlu0 0
    %564 = vperm.xlu0 %563, %v546
    %v565 = vpop.permute.xlu0 %564
    %v571 = vunpack.c.l.b16 %v539
    %v572 = vunpack.c.h.b16 %v539
    %v573 = vunpack.c.l.b16 %v540
    %v574 = vunpack.c.h.b16 %v540
    %v575 = vunpack.c.l.b16 %v541
    %v576 = vunpack.c.h.b16 %v541
    %v577 = vunpack.c.l.b16 %v542
    %v578 = vunpack.c.h.b16 %v542
    %v579 = vpack.c.b16 %v573, %v571
    %v580 = vpack.c.b16 %v574, %v572
    %v581 = vpack.c.b16 %v577, %v575
    %v582 = vpack.c.b16 %v578, %v576
    %vm585 = vcmask 261120
    %v587 = vsel %vm585, %v580, 0
    %v590 = vsel %vm585, %v582, 0
    %592 = vmatprep.subr.bf16.mxu0 %v519
    %593 = vmatpush1.bf16.msra.mxu0 %v519
    %594 = vmatprep.subr.bf16.mxu0 %v529
    %595 = vmatpush1.bf16.msra.mxu0 %v529
    %596 = vmatprep.subr.bf16.mxu0 %v519
    %597 = vmatpush1.bf16.msra.mxu0 %v519
    %598 = vmatprep.subr.bf16.mxu0 %v529
    %599 = vmatpush1.bf16.msra.mxu0 %v529
    %600 = vmatprep.subr.bf16.mxu0 %v520
    %601 = vmatpush1.bf16.msra.mxu0 %v519
    %602 = vmatprep.subr.bf16.mxu0 %v530
    %603 = vmatpush1.bf16.msra.mxu0 %v529
    %604 = vmatprep.subr.bf16.mxu0 %v522
    %605 = vmatpush1.bf16.msra.mxu0 %v521
    %606 = vmatprep.subr.bf16.mxu0 %v532
    %607 = vmatpush1.bf16.msra.mxu0 %v531
    %608 = vmatprep.subr.bf16.mxu0 %v524
    %609 = vmatpush1.bf16.msra.mxu0 %v523
    %610 = vmatprep.subr.bf16.mxu0 %v534
    %611 = vmatpush1.bf16.msra.mxu0 %v533
    %612 = vmatprep.subr.bf16.mxu0 0
    %613 = vmatpush1.bf16.msra.mxu0 0
    %614 = vmatprep.subr.bf16.mxu0 0
    %615 = vmatpush1.bf16.msra.mxu0 0
    %616 = vmatprep.subr.bf16.mxu0 0
    %617 = vmatpush1.bf16.msra.mxu0 0
    %618 = vmatprep.subr.bf16.mxu0 0
    %619 = vmatpush1.bf16.msra.mxu0 0
    %620 = vmatprep.subr.bf16.mxu0 0
    %621 = vmatpush1.bf16.msra.mxu0 0
    %622 = vmatprep.subr.bf16.mxu0 0
    %623 = vmatpush1.bf16.msra.mxu0 0
    %624 = vmatprep.mubr.bf16.mxu0 %v587
    %625 = vmatmul.mubr.bf16.gmra.mrb[0].mxu0 %v579
    %v626 = vpop.f32.mrb[0].mxu0
    %v627 = vadd.f32 %v550, %v626
    %v628 = vpop.f32.mrb[0].mxu0
    %v629 = vadd.f32 %v550, %v628
    %v630 = vpop.f32.mrb[0].mxu0
    %v631 = vadd.f32 %v555, %v630
    %v632 = vpop.f32.mrb[0].mxu0
    %v633 = vadd.f32 %v555, %v632
    %634 = vmatprep.mubr.bf16.mxu0 %v590
    %635 = vmatmul.mubr.bf16.gmra.mrb[0].mxu0 %v581
    %v636 = vpop.f32.mrb[0].mxu0
    %v637 = vadd.f32 %v560, %v636
    %v638 = vpop.f32.mrb[0].mxu0
    %v639 = vadd.f32 %v560, %v638
    %v640 = vpop.f32.mrb[0].mxu0
    %v641 = vadd.f32 %v565, %v640
    %v642 = vpop.f32.mrb[0].mxu0
    %v643 = vadd.f32 %v565, %v642
    %644 = vdwg.mxu0
    %645 = vmatprep.subr.bf16.mxu0 %v519
    %646 = vmatpush1.bf16.msra.mxu0 %v519
    %647 = vmatprep.subr.bf16.mxu0 %v529
    %648 = vmatpush1.bf16.msra.mxu0 %v529
    %649 = vmatprep.subr.bf16.mxu0 %v520
    %650 = vmatpush1.bf16.msra.mxu0 %v519
    %651 = vmatprep.subr.bf16.mxu0 %v530
    %652 = vmatpush1.bf16.msra.mxu0 %v529
    %653 = vmatprep.subr.bf16.mxu0 %v522
    %654 = vmatpush1.bf16.msra.mxu0 %v521
    %655 = vmatprep.subr.bf16.mxu0 %v532
    %656 = vmatpush1.bf16.msra.mxu0 %v531
    %657 = vmatprep.subr.bf16.mxu0 %v524
    %658 = vmatpush1.bf16.msra.mxu0 %v523
    %659 = vmatprep.subr.bf16.mxu0 %v534
    %660 = vmatpush1.bf16.msra.mxu0 %v533
    %661 = vmatprep.subr.bf16.mxu0 %v526
    %662 = vmatpush1.bf16.msra.mxu0 %v525
    %663 = vmatprep.subr.bf16.mxu0 %v536
    %664 = vmatpush1.bf16.msra.mxu0 %v535
    %665 = vmatprep.subr.bf16.mxu0 0
    %666 = vmatpush1.bf16.msra.mxu0 0
    %667 = vmatprep.subr.bf16.mxu0 0
    %668 = vmatpush1.bf16.msra.mxu0 0
    %669 = vmatprep.subr.bf16.mxu0 0
    %670 = vmatpush1.bf16.msra.mxu0 0
    %671 = vmatprep.subr.bf16.mxu0 0
    %672 = vmatpush1.bf16.msra.mxu0 0
    %673 = vmatprep.subr.bf16.mxu0 0
    %674 = vmatpush1.bf16.msra.mxu0 0
    %675 = vmatprep.subr.bf16.mxu0 0
    %676 = vmatpush1.bf16.msra.mxu0 0
    %677 = vmatprep.mubr.bf16.mxu0 %v587
    %678 = vmatmul.mubr.bf16.gmra.mrb[0].mxu0 %v579
    %v679 = vpop.f32.mrb[0].mxu0
    %v680 = vadd.f32 %v550, %v679
    %v681 = vpop.f32.mrb[0].mxu0
    %v682 = vadd.f32 %v550, %v681
    %v683 = vpop.f32.mrb[0].mxu0
    %v684 = vadd.f32 %v555, %v683
    %v685 = vpop.f32.mrb[0].mxu0
    %v686 = vadd.f32 %v555, %v685
    %687 = vmatprep.mubr.bf16.mxu0 %v590
    %688 = vmatmul.mubr.bf16.gmra.mrb[0].mxu0 %v581
    %v689 = vpop.f32.mrb[0].mxu0
    %v690 = vadd.f32 %v560, %v689
    %v691 = vpop.f32.mrb[0].mxu0
    %v692 = vadd.f32 %v560, %v691
    %v693 = vpop.f32.mrb[0].mxu0
    %v694 = vadd.f32 %v565, %v693
    %v695 = vpop.f32.mrb[0].mxu0
    %v696 = vadd.f32 %v565, %v695
    %697 = vdwg.mxu0
    %698 = vmatprep.subr.bf16.mxu0 %v520
    %699 = vmatpush1.bf16.msra.mxu0 %v519
    %700 = vmatprep.subr.bf16.mxu0 %v530
    %701 = vmatpush1.bf16.msra.mxu0 %v529
    %702 = vmatprep.subr.bf16.mxu0 %v522
    %703 = vmatpush1.bf16.msra.mxu0 %v521
    %704 = vmatprep.subr.bf16.mxu0 %v532
    %705 = vmatpush1.bf16.msra.mxu0 %v531
    %706 = vmatprep.subr.bf16.mxu0 %v524
    %707 = vmatpush1.bf16.msra.mxu0 %v523
    %708 = vmatprep.subr.bf16.mxu0 %v534
    %709 = vmatpush1.bf16.msra.mxu0 %v533
    %710 = vmatprep.subr.bf16.mxu0 %v526
    %711 = vmatpush1.bf16.msra.mxu0 %v525
    %712 = vmatprep.subr.bf16.mxu0 %v536
    %713 = vmatpush1.bf16.msra.mxu0 %v535
    %714 = vmatprep.subr.bf16.mxu0 %v528
    %715 = vmatpush1.bf16.msra.mxu0 %v527
    %716 = vmatprep.subr.bf16.mxu0 %v538
    %717 = vmatpush1.bf16.msra.mxu0 %v537
    %718 = vmatprep.subr.bf16.mxu0 0
    %719 = vmatpush1.bf16.msra.mxu0 0
    %720 = vmatprep.subr.bf16.mxu0 0
    %721 = vmatpush1.bf16.msra.mxu0 0
    %722 = vmatprep.subr.bf16.mxu0 0
    %723 = vmatpush1.bf16.msra.mxu0 0
    %724 = vmatprep.subr.bf16.mxu0 0
    %725 = vmatpush1.bf16.msra.mxu0 0
    %726 = vmatprep.subr.bf16.mxu0 0
    %727 = vmatpush1.bf16.msra.mxu0 0
    %728 = vmatprep.subr.bf16.mxu0 0
    %729 = vmatpush1.bf16.msra.mxu0 0
    %730 = vmatprep.mubr.bf16.mxu0 %v587
    %731 = vmatmul.mubr.bf16.gmra.mrb[0].mxu0 %v579
    %v732 = vpop.f32.mrb[0].mxu0
    %v733 = vadd.f32 %v550, %v732
    %v734 = vpop.f32.mrb[0].mxu0
    %v735 = vadd.f32 %v550, %v734
    %v736 = vpop.f32.mrb[0].mxu0
    %v737 = vadd.f32 %v555, %v736
    %v738 = vpop.f32.mrb[0].mxu0
    %v739 = vadd.f32 %v555, %v738
    %740 = vmatprep.mubr.bf16.mxu0 %v590
    %741 = vmatmul.mubr.bf16.gmra.mrb[0].mxu0 %v581
    %v742 = vpop.f32.mrb[0].mxu0
    %v743 = vadd.f32 %v560, %v742
    %v744 = vpop.f32.mrb[0].mxu0
    %v745 = vadd.f32 %v560, %v744
    %v746 = vpop.f32.mrb[0].mxu0
    %v747 = vadd.f32 %v565, %v746
    %v748 = vpop.f32.mrb[0].mxu0
    %v749 = vadd.f32 %v565, %v748
    %750 = vdwg.mxu0
    %751 = vmatprep.subr.bf16.mxu0 %v522
    %752 = vmatpush1.bf16.msra.mxu0 %v521
    %753 = vmatprep.subr.bf16.mxu0 %v532
    %754 = vmatpush1.bf16.msra.mxu0 %v531
    %755 = vmatprep.subr.bf16.mxu0 %v524
    %756 = vmatpush1.bf16.msra.mxu0 %v523
    %757 = vmatprep.subr.bf16.mxu0 %v534
    %758 = vmatpush1.bf16.msra.mxu0 %v533
    %759 = vmatprep.subr.bf16.mxu0 %v526
    %760 = vmatpush1.bf16.msra.mxu0 %v525
    %761 = vmatprep.subr.bf16.mxu0 %v536
    %762 = vmatpush1.bf16.msra.mxu0 %v535
    %763 = vmatprep.subr.bf16.mxu0 %v528
    %764 = vmatpush1.bf16.msra.mxu0 %v527
    %765 = vmatprep.subr.bf16.mxu0 %v538
    %766 = vmatpush1.bf16.msra.mxu0 %v537
    %767 = vmatprep.subr.bf16.mxu0 %v528
    %768 = vmatpush1.bf16.msra.mxu0 %v528
    %769 = vmatprep.subr.bf16.mxu0 %v538
    %770 = vmatpush1.bf16.msra.mxu0 %v538
    %771 = vmatprep.subr.bf16.mxu0 0
    %772 = vmatpush1.bf16.msra.mxu0 0
    %773 = vmatprep.subr.bf16.mxu0 0
    %774 = vmatpush1.bf16.msra.mxu0 0
    %775 = vmatprep.subr.bf16.mxu0 0
    %776 = vmatpush1.bf16.msra.mxu0 0
    %777 = vmatprep.subr.bf16.mxu0 0
    %778 = vmatpush1.bf16.msra.mxu0 0
    %779 = vmatprep.subr.bf16.mxu0 0
    %780 = vmatpush1.bf16.msra.mxu0 0
    %781 = vmatprep.subr.bf16.mxu0 0
    %782 = vmatpush1.bf16.msra.mxu0 0
    %783 = vmatprep.mubr.bf16.mxu0 %v587
    %784 = vmatmul.mubr.bf16.gmra.mrb[0].mxu0 %v579
    %v785 = vpop.f32.mrb[0].mxu0
    %v786 = vadd.f32 %v550, %v785
    %v787 = vpop.f32.mrb[0].mxu0
    %v788 = vadd.f32 %v550, %v787
    %v789 = vpop.f32.mrb[0].mxu0
    %v790 = vadd.f32 %v555, %v789
    %v791 = vpop.f32.mrb[0].mxu0
    %v792 = vadd.f32 %v555, %v791
    %793 = vmatprep.mubr.bf16.mxu0 %v590
    %794 = vmatmul.mubr.bf16.gmra.mrb[0].mxu0 %v581
    %v795 = vpop.f32.mrb[0].mxu0
    %v796 = vadd.f32 %v560, %v795
    %v797 = vpop.f32.mrb[0].mxu0
    %v798 = vadd.f32 %v560, %v797
    %v799 = vpop.f32.mrb[0].mxu0
    %v800 = vadd.f32 %v565, %v799
    %v801 = vpop.f32.mrb[0].mxu0
    %v802 = vadd.f32 %v565, %v801
    %803 = vdwg.mxu0
    %804 = vmatprep.subr.bf16.mxu0 %v524
    %805 = vmatpush1.bf16.msra.mxu0 %v523
    %806 = vmatprep.subr.bf16.mxu0 %v534
    %807 = vmatpush1.bf16.msra.mxu0 %v533
    %808 = vmatprep.subr.bf16.mxu0 %v526
    %809 = vmatpush1.bf16.msra.mxu0 %v525
    %810 = vmatprep.subr.bf16.mxu0 %v536
    %811 = vmatpush1.bf16.msra.mxu0 %v535
    %812 = vmatprep.subr.bf16.mxu0 %v528
    %813 = vmatpush1.bf16.msra.mxu0 %v527
    %814 = vmatprep.subr.bf16.mxu0 %v538
    %815 = vmatpush1.bf16.msra.mxu0 %v537
    %816 = vmatprep.subr.bf16.mxu0 %v528
    %817 = vmatpush1.bf16.msra.mxu0 %v528
    %818 = vmatprep.subr.bf16.mxu0 %v538
    %819 = vmatpush1.bf16.msra.mxu0 %v538
    %820 = vmatprep.subr.bf16.mxu0 %v528
    %821 = vmatpush1.bf16.msra.mxu0 %v528
    %822 = vmatprep.subr.bf16.mxu0 %v538
    %823 = vmatpush1.bf16.msra.mxu0 %v538
    %824 = vmatprep.subr.bf16.mxu0 0
    %825 = vmatpush1.bf16.msra.mxu0 0
    %826 = vmatprep.subr.bf16.mxu0 0
    %827 = vmatpush1.bf16.msra.mxu0 0
    %828 = vmatprep.subr.bf16.mxu0 0
    %829 = vmatpush1.bf16.msra.mxu0 0
    %830 = vmatprep.subr.bf16.mxu0 0
    %831 = vmatpush1.bf16.msra.mxu0 0
    %832 = vmatprep.subr.bf16.mxu0 0
    %833 = vmatpush1.bf16.msra.mxu0 0
    %834 = vmatprep.subr.bf16.mxu0 0
    %835 = vmatpush1.bf16.msra.mxu0 0
    %836 = vmatprep.mubr.bf16.mxu0 %v587
    %837 = vmatmul.mubr.bf16.gmra.mrb[0].mxu0 %v579
    %v838 = vpop.f32.mrb[0].mxu0
    %v839 = vadd.f32 %v550, %v838
    %v840 = vpop.f32.mrb[0].mxu0
    %v841 = vadd.f32 %v550, %v840
    %v842 = vpop.f32.mrb[0].mxu0
    %v843 = vadd.f32 %v555, %v842
    %v844 = vpop.f32.mrb[0].mxu0
    %v845 = vadd.f32 %v555, %v844
    %846 = vmatprep.mubr.bf16.mxu0 %v590
    %847 = vmatmul.mubr.bf16.gmra.mrb[0].mxu0 %v581
    %v848 = vpop.f32.mrb[0].mxu0
    %v849 = vadd.f32 %v560, %v848
    %v850 = vpop.f32.mrb[0].mxu0
    %v851 = vadd.f32 %v560, %v850
    %v852 = vpop.f32.mrb[0].mxu0
    %v853 = vadd.f32 %v565, %v852
    %v854 = vpop.f32.mrb[0].mxu0
    %v855 = vadd.f32 %v565, %v854
    %856 = vdwg.mxu0
    %v857 = vmax.f32 %v627, 0.0
    %v858 = vmax.f32 %v629, 0.0
    %v859 = vmax.f32 %v680, 0.0
    %v860 = vmax.f32 %v682, 0.0
    %v861 = vmax.f32 %v733, 0.0
    %v862 = vmax.f32 %v735, 0.0
    %v863 = vmax.f32 %v786, 0.0
    %v864 = vmax.f32 %v788, 0.0
    %v865 = vmax.f32 %v839, 0.0
    %v866 = vmax.f32 %v841, 0.0
    %v867 = vmax.f32 %v631, 0.0
    %v868 = vmax.f32 %v633, 0.0
    %v869 = vmax.f32 %v684, 0.0
    %v870 = vmax.f32 %v686, 0.0
    %v871 = vmax.f32 %v737, 0.0
    %v872 = vmax.f32 %v739, 0.0
    %v873 = vmax.f32 %v790, 0.0
    %v874 = vmax.f32 %v792, 0.0
    %v875 = vmax.f32 %v843, 0.0
    %v876 = vmax.f32 %v845, 0.0
    %v877 = vmax.f32 %v637, 0.0
    %v878 = vmax.f32 %v639, 0.0
    %v879 = vmax.f32 %v690, 0.0
    %v880 = vmax.f32 %v692, 0.0
    %v881 = vmax.f32 %v743, 0.0
    %v882 = vmax.f32 %v745, 0.0
    %v883 = vmax.f32 %v796, 0.0
    %v884 = vmax.f32 %v798, 0.0
    %v885 = vmax.f32 %v849, 0.0
    %v886 = vmax.f32 %v851, 0.0
    %v887 = vmax.f32 %v641, 0.0
    %v888 = vmax.f32 %v643, 0.0
    %v889 = vmax.f32 %v694, 0.0
    %v890 = vmax.f32 %v696, 0.0
    %v891 = vmax.f32 %v747, 0.0
    %v892 = vmax.f32 %v749, 0.0
    %v893 = vmax.f32 %v800, 0.0
    %v894 = vmax.f32 %v802, 0.0
    %v895 = vmax.f32 %v853, 0.0
    %v896 = vmax.f32 %v855, 0.0
    %v897 = vadd.f32 %v479, %v857
    %v898 = vadd.f32 %v480, %v858
    %v899 = vadd.f32 %v481, %v859
    %v900 = vadd.f32 %v482, %v860
    %v901 = vadd.f32 %v483, %v861
    %v902 = vadd.f32 %v484, %v862
    %v903 = vadd.f32 %v485, %v863
    %v904 = vadd.f32 %v486, %v864
    %v905 = vadd.f32 %v487, %v865
    %v906 = vadd.f32 %v488, %v866
    %v907 = vadd.f32 %v489, %v867
    %v908 = vadd.f32 %v490, %v868
    %v909 = vadd.f32 %v491, %v869
    %v910 = vadd.f32 %v492, %v870
    %v911 = vadd.f32 %v493, %v871
    %v912 = vadd.f32 %v494, %v872
    %v913 = vadd.f32 %v495, %v873
    %v914 = vadd.f32 %v496, %v874
    %v915 = vadd.f32 %v497, %v875
    %v916 = vadd.f32 %v498, %v876
    %v917 = vadd.f32 %v499, %v877
    %v918 = vadd.f32 %v500, %v878
    %v919 = vadd.f32 %v501, %v879
    %v920 = vadd.f32 %v502, %v880
    %v921 = vadd.f32 %v503, %v881
    %v922 = vadd.f32 %v504, %v882
    %v923 = vadd.f32 %v505, %v883
    %v924 = vadd.f32 %v506, %v884
    %v925 = vadd.f32 %v507, %v885
    %v926 = vadd.f32 %v508, %v886
    %v927 = vadd.f32 %v509, %v887
    %v928 = vadd.f32 %v510, %v888
    %v929 = vadd.f32 %v511, %v889
    %v930 = vadd.f32 %v512, %v890
    %v931 = vadd.f32 %v513, %v891
    %v932 = vadd.f32 %v514, %v892
    %v933 = vadd.f32 %v515, %v893
    %v934 = vadd.f32 %v516, %v894
    %v935 = vadd.f32 %v517, %v895
    %v936 = vadd.f32 %v518, %v896
    %v937 = vpack.c.bf16 %v907, %v897
    %v938 = vpack.c.bf16 %v908, %v898
    %v939 = vpack.c.bf16 %v909, %v899
    %v940 = vpack.c.bf16 %v910, %v900
    %v941 = vpack.c.bf16 %v911, %v901
    %v942 = vpack.c.bf16 %v912, %v902
    %v943 = vpack.c.bf16 %v913, %v903
    %v944 = vpack.c.bf16 %v914, %v904
    %v945 = vpack.c.bf16 %v915, %v905
    %v946 = vpack.c.bf16 %v916, %v906
    %v947 = vpack.c.bf16 %v927, %v917
    %v948 = vpack.c.bf16 %v928, %v918
    %v949 = vpack.c.bf16 %v929, %v919
    %v950 = vpack.c.bf16 %v930, %v920
    %v951 = vpack.c.bf16 %v931, %v921
    %v952 = vpack.c.bf16 %v932, %v922
    %v953 = vpack.c.bf16 %v933, %v923
    %v954 = vpack.c.bf16 %v934, %v924
    %v955 = vpack.c.bf16 %v935, %v925
    %v956 = vpack.c.bf16 %v936, %v926
    %s957 = scalar_lea.vmem [#allocation2], 32
    %v958 = vld [vmem:[%s957] sm:$0xff]
    %v959 = vld [vmem:[%s957 + $0x8] sm:$0xff]
    %v960 = vld [vmem:[%s957 + $0x10] sm:$0xff]
    %v961 = vld [vmem:[%s957 + $0x18] sm:$0xff]
    %s962 = scalar_lea.vmem %s4, 32
    %v963 = vld [vmem:[%s962] sm:$0xff]
    %v964 = vld [vmem:[%s962 + $0x8] sm:$0xff]
    %v965 = vld [vmem:[%s962 + $0x10] sm:$0xff]
    %v966 = vld [vmem:[%s962 + $0x18] sm:$0xff]
    %968 = vset.pattern.permute.xlu0 0
    %969 = vperm.xlu0 %968, %v963
    %v970 = vpop.permute.xlu0 %969
    %973 = vset.pattern.permute.xlu0 0
    %974 = vperm.xlu0 %973, %v964
    %v975 = vpop.permute.xlu0 %974
    %978 = vset.pattern.permute.xlu0 0
    %979 = vperm.xlu0 %978, %v965
    %v980 = vpop.permute.xlu0 %979
    %983 = vset.pattern.permute.xlu0 0
    %984 = vperm.xlu0 %983, %v966
    %v985 = vpop.permute.xlu0 %984
    %v991 = vunpack.c.l.b16 %v958
    %v992 = vunpack.c.h.b16 %v958
    %v993 = vunpack.c.l.b16 %v959
    %v994 = vunpack.c.h.b16 %v959
    %v995 = vunpack.c.l.b16 %v960
    %v996 = vunpack.c.h.b16 %v960
    %v997 = vunpack.c.l.b16 %v961
    %v998 = vunpack.c.h.b16 %v961
    %v999 = vpack.c.b16 %v993, %v991
    %v1000 = vpack.c.b16 %v994, %v992
    %v1001 = vpack.c.b16 %v997, %v995
    %v1002 = vpack.c.b16 %v998, %v996
    %v1006 = vsel %vm585, %v1000, 0
    %v1009 = vsel %vm585, %v1002, 0
    %1011 = vmatprep.subr.bf16.mxu0 %v937
    %1012 = vmatpush1.bf16.msra.mxu0 %v937
    %1013 = vmatprep.subr.bf16.mxu0 %v947
    %1014 = vmatpush1.bf16.msra.mxu0 %v947
    %1015 = vmatprep.subr.bf16.mxu0 %v937
    %1016 = vmatpush1.bf16.msra.mxu0 %v937
    %1017 = vmatprep.subr.bf16.mxu0 %v947
    %1018 = vmatpush1.bf16.msra.mxu0 %v947
    %1019 = vmatprep.subr.bf16.mxu0 %v938
    %1020 = vmatpush1.bf16.msra.mxu0 %v937
    %1021 = vmatprep.subr.bf16.mxu0 %v948
    %1022 = vmatpush1.bf16.msra.mxu0 %v947
    %1023 = vmatprep.subr.bf16.mxu0 %v940
    %1024 = vmatpush1.bf16.msra.mxu0 %v939
    %1025 = vmatprep.subr.bf16.mxu0 %v950
    %1026 = vmatpush1.bf16.msra.mxu0 %v949
    %1027 = vmatprep.subr.bf16.mxu0 %v942
    %1028 = vmatpush1.bf16.msra.mxu0 %v941
    %1029 = vmatprep.subr.bf16.mxu0 %v952
    %1030 = vmatpush1.bf16.msra.mxu0 %v951
    %1031 = vmatprep.subr.bf16.mxu0 0
    %1032 = vmatpush1.bf16.msra.mxu0 0
    %1033 = vmatprep.subr.bf16.mxu0 0
    %1034 = vmatpush1.bf16.msra.mxu0 0
    %1035 = vmatprep.subr.bf16.mxu0 0
    %1036 = vmatpush1.bf16.msra.mxu0 0
    %1037 = vmatprep.subr.bf16.mxu0 0
    %1038 = vmatpush1.bf16.msra.mxu0 0
    %1039 = vmatprep.subr.bf16.mxu0 0
    %1040 = vmatpush1.bf16.msra.mxu0 0
    %1041 = vmatprep.subr.bf16.mxu0 0
    %1042 = vmatpush1.bf16.msra.mxu0 0
    %1043 = vmatprep.mubr.bf16.mxu0 %v1006
    %1044 = vmatmul.mubr.bf16.gmra.mrb[0].mxu0 %v999
    %v1045 = vpop.f32.mrb[0].mxu0
    %v1046 = vadd.f32 %v970, %v1045
    %v1047 = vpop.f32.mrb[0].mxu0
    %v1048 = vadd.f32 %v970, %v1047
    %v1049 = vpop.f32.mrb[0].mxu0
    %v1050 = vadd.f32 %v975, %v1049
    %v1051 = vpop.f32.mrb[0].mxu0
    %v1052 = vadd.f32 %v975, %v1051
    %1053 = vmatprep.mubr.bf16.mxu0 %v1009
    %1054 = vmatmul.mubr.bf16.gmra.mrb[0].mxu0 %v1001
    %v1055 = vpop.f32.mrb[0].mxu0
    %v1056 = vadd.f32 %v980, %v1055
    %v1057 = vpop.f32.mrb[0].mxu0
    %v1058 = vadd.f32 %v980, %v1057
    %v1059 = vpop.f32.mrb[0].mxu0
    %v1060 = vadd.f32 %v985, %v1059
    %v1061 = vpop.f32.mrb[0].mxu0
    %v1062 = vadd.f32 %v985, %v1061
    %1063 = vdwg.mxu0
    %1064 = vmatprep.subr.bf16.mxu0 %v937
    %1065 = vmatpush1.bf16.msra.mxu0 %v937
    %1066 = vmatprep.subr.bf16.mxu0 %v947
    %1067 = vmatpush1.bf16.msra.mxu0 %v947
    %1068 = vmatprep.subr.bf16.mxu0 %v938
    %1069 = vmatpush1.bf16.msra.mxu0 %v937
    %1070 = vmatprep.subr.bf16.mxu0 %v948
    %1071 = vmatpush1.bf16.msra.mxu0 %v947
    %1072 = vmatprep.subr.bf16.mxu0 %v940
    %1073 = vmatpush1.bf16.msra.mxu0 %v939
    %1074 = vmatprep.subr.bf16.mxu0 %v950
    %1075 = vmatpush1.bf16.msra.mxu0 %v949
    %1076 = vmatprep.subr.bf16.mxu0 %v942
    %1077 = vmatpush1.bf16.msra.mxu0 %v941
    %1078 = vmatprep.subr.bf16.mxu0 %v952
    %1079 = vmatpush1.bf16.msra.mxu0 %v951
    %1080 = vmatprep.subr.bf16.mxu0 %v944
    %1081 = vmatpush1.bf16.msra.mxu0 %v943
    %1082 = vmatprep.subr.bf16.mxu0 %v954
    %1083 = vmatpush1.bf16.msra.mxu0 %v953
    %1084 = vmatprep.subr.bf16.mxu0 0
    %1085 = vmatpush1.bf16.msra.mxu0 0
    %1086 = vmatprep.subr.bf16.mxu0 0
    %1087 = vmatpush1.bf16.msra.mxu0 0
    %1088 = vmatprep.subr.bf16.mxu0 0
    %1089 = vmatpush1.bf16.msra.mxu0 0
    %1090 = vmatprep.subr.bf16.mxu0 0
    %1091 = vmatpush1.bf16.msra.mxu0 0
    %1092 = vmatprep.subr.bf16.mxu0 0
    %1093 = vmatpush1.bf16.msra.mxu0 0
    %1094 = vmatprep.subr.bf16.mxu0 0
    %1095 = vmatpush1.bf16.msra.mxu0 0
    %1096 = vmatprep.mubr.bf16.mxu0 %v1006
    %1097 = vmatmul.mubr.bf16.gmra.mrb[0].mxu0 %v999
    %v1098 = vpop.f32.mrb[0].mxu0
    %v1099 = vadd.f32 %v970, %v1098
    %v1100 = vpop.f32.mrb[0].mxu0
    %v1101 = vadd.f32 %v970, %v1100
    %v1102 = vpop.f32.mrb[0].mxu0
    %v1103 = vadd.f32 %v975, %v1102
    %v1104 = vpop.f32.mrb[0].mxu0
    %v1105 = vadd.f32 %v975, %v1104
    %1106 = vmatprep.mubr.bf16.mxu0 %v1009
    %1107 = vmatmul.mubr.bf16.gmra.mrb[0].mxu0 %v1001
    %v1108 = vpop.f32.mrb[0].mxu0
    %v1109 = vadd.f32 %v980, %v1108
    %v1110 = vpop.f32.mrb[0].mxu0
    %v1111 = vadd.f32 %v980, %v1110
    %v1112 = vpop.f32.mrb[0].mxu0
    %v1113 = vadd.f32 %v985, %v1112
    %v1114 = vpop.f32.mrb[0].mxu0
    %v1115 = vadd.f32 %v985, %v1114
    %1116 = vdwg.mxu0
    %1117 = vmatprep.subr.bf16.mxu0 %v938
    %1118 = vmatpush1.bf16.msra.mxu0 %v937
    %1119 = vmatprep.subr.bf16.mxu0 %v948
    %1120 = vmatpush1.bf16.msra.mxu0 %v947
    %1121 = vmatprep.subr.bf16.mxu0 %v940
    %1122 = vmatpush1.bf16.msra.mxu0 %v939
    %1123 = vmatprep.subr.bf16.mxu0 %v950
    %1124 = vmatpush1.bf16.msra.mxu0 %v949
    %1125 = vmatprep.subr.bf16.mxu0 %v942
    %1126 = vmatpush1.bf16.msra.mxu0 %v941
    %1127 = vmatprep.subr.bf16.mxu0 %v952
    %1128 = vmatpush1.bf16.msra.mxu0 %v951
    %1129 = vmatprep.subr.bf16.mxu0 %v944
    %1130 = vmatpush1.bf16.msra.mxu0 %v943
    %1131 = vmatprep.subr.bf16.mxu0 %v954
    %1132 = vmatpush1.bf16.msra.mxu0 %v953
    %1133 = vmatprep.subr.bf16.mxu0 %v946
    %1134 = vmatpush1.bf16.msra.mxu0 %v945
    %1135 = vmatprep.subr.bf16.mxu0 %v956
    %1136 = vmatpush1.bf16.msra.mxu0 %v955
    %1137 = vmatprep.subr.bf16.mxu0 0
    %1138 = vmatpush1.bf16.msra.mxu0 0
    %1139 = vmatprep.subr.bf16.mxu0 0
    %1140 = vmatpush1.bf16.msra.mxu0 0
    %1141 = vmatprep.subr.bf16.mxu0 0
    %1142 = vmatpush1.bf16.msra.mxu0 0
    %1143 = vmatprep.subr.bf16.mxu0 0
    %1144 = vmatpush1.bf16.msra.mxu0 0
    %1145 = vmatprep.subr.bf16.mxu0 0
    %1146 = vmatpush1.bf16.msra.mxu0 0
    %1147 = vmatprep.subr.bf16.mxu0 0
    %1148 = vmatpush1.bf16.msra.mxu0 0
    %1149 = vmatprep.mubr.bf16.mxu0 %v1006
    %1150 = vmatmul.mubr.bf16.gmra.mrb[0].mxu0 %v999
    %v1151 = vpop.f32.mrb[0].mxu0
    %v1152 = vadd.f32 %v970, %v1151
    %v1153 = vpop.f32.mrb[0].mxu0
    %v1154 = vadd.f32 %v970, %v1153
    %v1155 = vpop.f32.mrb[0].mxu0
    %v1156 = vadd.f32 %v975, %v1155
    %v1157 = vpop.f32.mrb[0].mxu0
    %v1158 = vadd.f32 %v975, %v1157
    %1159 = vmatprep.mubr.bf16.mxu0 %v1009
    %1160 = vmatmul.mubr.bf16.gmra.mrb[0].mxu0 %v1001
    %v1161 = vpop.f32.mrb[0].mxu0
    %v1162 = vadd.f32 %v980, %v1161
    %v1163 = vpop.f32.mrb[0].mxu0
    %v1164 = vadd.f32 %v980, %v1163
    %v1165 = vpop.f32.mrb[0].mxu0
    %v1166 = vadd.f32 %v985, %v1165
    %v1167 = vpop.f32.mrb[0].mxu0
    %v1168 = vadd.f32 %v985, %v1167
    %1169 = vdwg.mxu0
    %1170 = vmatprep.subr.bf16.mxu0 %v940
    %1171 = vmatpush1.bf16.msra.mxu0 %v939
    %1172 = vmatprep.subr.bf16.mxu0 %v950
    %1173 = vmatpush1.bf16.msra.mxu0 %v949
    %1174 = vmatprep.subr.bf16.mxu0 %v942
    %1175 = vmatpush1.bf16.msra.mxu0 %v941
    %1176 = vmatprep.subr.bf16.mxu0 %v952
    %1177 = vmatpush1.bf16.msra.mxu0 %v951
    %1178 = vmatprep.subr.bf16.mxu0 %v944
    %1179 = vmatpush1.bf16.msra.mxu0 %v943
    %1180 = vmatprep.subr.bf16.mxu0 %v954
    %1181 = vmatpush1.bf16.msra.mxu0 %v953
    %1182 = vmatprep.subr.bf16.mxu0 %v946
    %1183 = vmatpush1.bf16.msra.mxu0 %v945
    %1184 = vmatprep.subr.bf16.mxu0 %v956
    %1185 = vmatpush1.bf16.msra.mxu0 %v955
    %1186 = vmatprep.subr.bf16.mxu0 %v946
    %1187 = vmatpush1.bf16.msra.mxu0 %v946
    %1188 = vmatprep.subr.bf16.mxu0 %v956
    %1189 = vmatpush1.bf16.msra.mxu0 %v956
    %1190 = vmatprep.subr.bf16.mxu0 0
    %1191 = vmatpush1.bf16.msra.mxu0 0
    %1192 = vmatprep.subr.bf16.mxu0 0
    %1193 = vmatpush1.bf16.msra.mxu0 0
    %1194 = vmatprep.subr.bf16.mxu0 0
    %1195 = vmatpush1.bf16.msra.mxu0 0
    %1196 = vmatprep.subr.bf16.mxu0 0
    %1197 = vmatpush1.bf16.msra.mxu0 0
    %1198 = vmatprep.subr.bf16.mxu0 0
    %1199 = vmatpush1.bf16.msra.mxu0 0
    %1200 = vmatprep.subr.bf16.mxu0 0
    %1201 = vmatpush1.bf16.msra.mxu0 0
    %1202 = vmatprep.mubr.bf16.mxu0 %v1006
    %1203 = vmatmul.mubr.bf16.gmra.mrb[0].mxu0 %v999
    %v1204 = vpop.f32.mrb[0].mxu0
    %v1205 = vadd.f32 %v970, %v1204
    %v1206 = vpop.f32.mrb[0].mxu0
    %v1207 = vadd.f32 %v970, %v1206
    %v1208 = vpop.f32.mrb[0].mxu0
    %v1209 = vadd.f32 %v975, %v1208
    %v1210 = vpop.f32.mrb[0].mxu0
    %v1211 = vadd.f32 %v975, %v1210
    %1212 = vmatprep.mubr.bf16.mxu0 %v1009
    %1213 = vmatmul.mubr.bf16.gmra.mrb[0].mxu0 %v1001
    %v1214 = vpop.f32.mrb[0].mxu0
    %v1215 = vadd.f32 %v980, %v1214
    %v1216 = vpop.f32.mrb[0].mxu0
    %v1217 = vadd.f32 %v980, %v1216
    %v1218 = vpop.f32.mrb[0].mxu0
    %v1219 = vadd.f32 %v985, %v1218
    %v1220 = vpop.f32.mrb[0].mxu0
    %v1221 = vadd.f32 %v985, %v1220
    %1222 = vdwg.mxu0
    %1223 = vmatprep.subr.bf16.mxu0 %v942
    %1224 = vmatpush1.bf16.msra.mxu0 %v941
    %1225 = vmatprep.subr.bf16.mxu0 %v952
    %1226 = vmatpush1.bf16.msra.mxu0 %v951
    %1227 = vmatprep.subr.bf16.mxu0 %v944
    %1228 = vmatpush1.bf16.msra.mxu0 %v943
    %1229 = vmatprep.subr.bf16.mxu0 %v954
    %1230 = vmatpush1.bf16.msra.mxu0 %v953
    %1231 = vmatprep.subr.bf16.mxu0 %v946
    %1232 = vmatpush1.bf16.msra.mxu0 %v945
    %1233 = vmatprep.subr.bf16.mxu0 %v956
    %1234 = vmatpush1.bf16.msra.mxu0 %v955
    %1235 = vmatprep.subr.bf16.mxu0 %v946
    %1236 = vmatpush1.bf16.msra.mxu0 %v946
    %1237 = vmatprep.subr.bf16.mxu0 %v956
    %1238 = vmatpush1.bf16.msra.mxu0 %v956
    %1239 = vmatprep.subr.bf16.mxu0 %v946
    %1240 = vmatpush1.bf16.msra.mxu0 %v946
    %1241 = vmatprep.subr.bf16.mxu0 %v956
    %1242 = vmatpush1.bf16.msra.mxu0 %v956
    %1243 = vmatprep.subr.bf16.mxu0 0
    %1244 = vmatpush1.bf16.msra.mxu0 0
    %1245 = vmatprep.subr.bf16.mxu0 0
    %1246 = vmatpush1.bf16.msra.mxu0 0
    %1247 = vmatprep.subr.bf16.mxu0 0
    %1248 = vmatpush1.bf16.msra.mxu0 0
    %1249 = vmatprep.subr.bf16.mxu0 0
    %1250 = vmatpush1.bf16.msra.mxu0 0
    %1251 = vmatprep.subr.bf16.mxu0 0
    %1252 = vmatpush1.bf16.msra.mxu0 0
    %1253 = vmatprep.subr.bf16.mxu0 0
    %1254 = vmatpush1.bf16.msra.mxu0 0
    %1255 = vmatprep.mubr.bf16.mxu0 %v1006
    %1256 = vmatmul.mubr.bf16.gmra.mrb[0].mxu0 %v999
    %v1257 = vpop.f32.mrb[0].mxu0
    %v1258 = vadd.f32 %v970, %v1257
    %v1259 = vpop.f32.mrb[0].mxu0
    %v1260 = vadd.f32 %v970, %v1259
    %v1261 = vpop.f32.mrb[0].mxu0
    %v1262 = vadd.f32 %v975, %v1261
    %v1263 = vpop.f32.mrb[0].mxu0
    %v1264 = vadd.f32 %v975, %v1263
    %1265 = vmatprep.mubr.bf16.mxu0 %v1009
    %1266 = vmatmul.mubr.bf16.gmra.mrb[0].mxu0 %v1001
    %v1267 = vpop.f32.mrb[0].mxu0
    %v1268 = vadd.f32 %v980, %v1267
    %v1269 = vpop.f32.mrb[0].mxu0
    %v1270 = vadd.f32 %v980, %v1269
    %v1271 = vpop.f32.mrb[0].mxu0
    %v1272 = vadd.f32 %v985, %v1271
    %v1273 = vpop.f32.mrb[0].mxu0
    %v1274 = vadd.f32 %v985, %v1273
    %1275 = vdwg.mxu0
    %v1276 = vmax.f32 %v1046, 0.0
    %v1277 = vmax.f32 %v1048, 0.0
    %v1278 = vmax.f32 %v1099, 0.0
    %v1279 = vmax.f32 %v1101, 0.0
    %v1280 = vmax.f32 %v1152, 0.0
    %v1281 = vmax.f32 %v1154, 0.0
    %v1282 = vmax.f32 %v1205, 0.0
    %v1283 = vmax.f32 %v1207, 0.0
    %v1284 = vmax.f32 %v1258, 0.0
    %v1285 = vmax.f32 %v1260, 0.0
    %v1286 = vmax.f32 %v1050, 0.0
    %v1287 = vmax.f32 %v1052, 0.0
    %v1288 = vmax.f32 %v1103, 0.0
    %v1289 = vmax.f32 %v1105, 0.0
    %v1290 = vmax.f32 %v1156, 0.0
    %v1291 = vmax.f32 %v1158, 0.0
    %v1292 = vmax.f32 %v1209, 0.0
    %v1293 = vmax.f32 %v1211, 0.0
    %v1294 = vmax.f32 %v1262, 0.0
    %v1295 = vmax.f32 %v1264, 0.0
    %v1296 = vmax.f32 %v1056, 0.0
    %v1297 = vmax.f32 %v1058, 0.0
    %v1298 = vmax.f32 %v1109, 0.0
    %v1299 = vmax.f32 %v1111, 0.0
    %v1300 = vmax.f32 %v1162, 0.0
    %v1301 = vmax.f32 %v1164, 0.0
    %v1302 = vmax.f32 %v1215, 0.0
    %v1303 = vmax.f32 %v1217, 0.0
    %v1304 = vmax.f32 %v1268, 0.0
    %v1305 = vmax.f32 %v1270, 0.0
    %v1306 = vmax.f32 %v1060, 0.0
    %v1307 = vmax.f32 %v1062, 0.0
    %v1308 = vmax.f32 %v1113, 0.0
    %v1309 = vmax.f32 %v1115, 0.0
    %v1310 = vmax.f32 %v1166, 0.0
    %v1311 = vmax.f32 %v1168, 0.0
    %v1312 = vmax.f32 %v1219, 0.0
    %v1313 = vmax.f32 %v1221, 0.0
    %v1314 = vmax.f32 %v1272, 0.0
    %v1315 = vmax.f32 %v1274, 0.0
    %v1316 = vadd.f32 %v897, %v1276
    %v1317 = vadd.f32 %v898, %v1277
    %v1318 = vadd.f32 %v899, %v1278
    %v1319 = vadd.f32 %v900, %v1279
    %v1320 = vadd.f32 %v901, %v1280
    %v1321 = vadd.f32 %v902, %v1281
    %v1322 = vadd.f32 %v903, %v1282
    %v1323 = vadd.f32 %v904, %v1283
    %v1324 = vadd.f32 %v905, %v1284
    %v1325 = vadd.f32 %v906, %v1285
    %v1326 = vadd.f32 %v907, %v1286
    %v1327 = vadd.f32 %v908, %v1287
    %v1328 = vadd.f32 %v909, %v1288
    %v1329 = vadd.f32 %v910, %v1289
    %v1330 = vadd.f32 %v911, %v1290
    %v1331 = vadd.f32 %v912, %v1291
    %v1332 = vadd.f32 %v913, %v1292
    %v1333 = vadd.f32 %v914, %v1293
    %v1334 = vadd.f32 %v915, %v1294
    %v1335 = vadd.f32 %v916, %v1295
    %v1336 = vadd.f32 %v917, %v1296
    %v1337 = vadd.f32 %v918, %v1297
    %v1338 = vadd.f32 %v919, %v1298
    %v1339 = vadd.f32 %v920, %v1299
    %v1340 = vadd.f32 %v921, %v1300
    %v1341 = vadd.f32 %v922, %v1301
    %v1342 = vadd.f32 %v923, %v1302
    %v1343 = vadd.f32 %v924, %v1303
    %v1344 = vadd.f32 %v925, %v1304
    %v1345 = vadd.f32 %v926, %v1305
    %v1346 = vadd.f32 %v927, %v1306
    %v1347 = vadd.f32 %v928, %v1307
    %v1348 = vadd.f32 %v929, %v1308
    %v1349 = vadd.f32 %v930, %v1309
    %v1350 = vadd.f32 %v931, %v1310
    %v1351 = vadd.f32 %v932, %v1311
    %v1352 = vadd.f32 %v933, %v1312
    %v1353 = vadd.f32 %v934, %v1313
    %v1354 = vadd.f32 %v935, %v1314
    %v1355 = vadd.f32 %v936, %v1315
    %v1356 = vpack.c.bf16 %v1326, %v1316
    %v1357 = vpack.c.bf16 %v1327, %v1317
    %v1358 = vpack.c.bf16 %v1328, %v1318
    %v1359 = vpack.c.bf16 %v1329, %v1319
    %v1360 = vpack.c.bf16 %v1330, %v1320
    %v1361 = vpack.c.bf16 %v1331, %v1321
    %v1362 = vpack.c.bf16 %v1332, %v1322
    %v1363 = vpack.c.bf16 %v1333, %v1323
    %v1364 = vpack.c.bf16 %v1334, %v1324
    %v1365 = vpack.c.bf16 %v1335, %v1325
    %v1366 = vpack.c.bf16 %v1346, %v1336
    %v1367 = vpack.c.bf16 %v1347, %v1337
    %v1368 = vpack.c.bf16 %v1348, %v1338
    %v1369 = vpack.c.bf16 %v1349, %v1339
    %v1370 = vpack.c.bf16 %v1350, %v1340
    %v1371 = vpack.c.bf16 %v1351, %v1341
    %v1372 = vpack.c.bf16 %v1352, %v1342
    %v1373 = vpack.c.bf16 %v1353, %v1343
    %v1374 = vpack.c.bf16 %v1354, %v1344
    %v1375 = vpack.c.bf16 %v1355, %v1345
    %v1376 = vld [vmem:[%s5] sm:$0xff]
    %v1377 = vld [vmem:[%s5 + $0x8] sm:$0xf]
    %v1378 = vld [vmem:[%s5 + $0xc] sm:$0xff]
    %v1379 = vld [vmem:[%s5 + $0x14] sm:$0xf]
    %v1380 = vld [vmem:[%s5 + $0x18] sm:$0xff]
    %v1381 = vld [vmem:[%s5 + $0x20] sm:$0xf]
    %v1382 = vld [vmem:[%s5 + $0x24] sm:$0xff]
    %v1383 = vld [vmem:[%s5 + $0x2c] sm:$0xf]
    %v1384 = vld [vmem:[%s6] sm:$0xff]
    %v1385 = vld [vmem:[%s6 + $0x8] sm:$0xff]
    %v1386 = vld [vmem:[%s6 + $0x10] sm:$0xff]
    %v1387 = vld [vmem:[%s6 + $0x18] sm:$0xff]
    %1389 = vset.pattern.permute.xlu0 0
    %1390 = vperm.xlu0 %1389, %v1384
    %v1391 = vpop.permute.xlu0 %1390
    %1394 = vset.pattern.permute.xlu0 0
    %1395 = vperm.xlu0 %1394, %v1385
    %v1396 = vpop.permute.xlu0 %1395
    %1399 = vset.pattern.permute.xlu0 0
    %1400 = vperm.xlu0 %1399, %v1386
    %v1401 = vpop.permute.xlu0 %1400
    %1404 = vset.pattern.permute.xlu0 0
    %1405 = vperm.xlu0 %1404, %v1387
    %v1406 = vpop.permute.xlu0 %1405
    %v1416 = vunpack.c.l.b16 %v1376
    %v1417 = vunpack.c.h.b16 %v1376
    %v1418 = vunpack.c.l.b16 %v1377
    %v1419 = vunpack.c.l.b16 %v1378
    %v1420 = vunpack.c.h.b16 %v1378
    %v1421 = vunpack.c.l.b16 %v1379
    %v1422 = vunpack.c.l.b16 %v1380
    %v1423 = vunpack.c.h.b16 %v1380
    %v1424 = vunpack.c.l.b16 %v1381
    %v1425 = vunpack.c.l.b16 %v1382
    %v1426 = vunpack.c.h.b16 %v1382
    %v1427 = vunpack.c.l.b16 %v1383
    %v1428 = vpack.c.b16 %v1419, %v1416
    %v1429 = vpack.c.b16 %v1420, %v1417
    %v1430 = vpack.c.b16 %v1421, %v1418
    %v1431 = vpack.c.b16 %v1425, %v1422
    %v1432 = vpack.c.b16 %v1426, %v1423
    %v1433 = vpack.c.b16 %v1427, %v1424
    %vm1438 = vcmask 523264
    %v1440 = vsel %vm1438, %v1430, 0
    %v1443 = vsel %vm1438, %v1433, 0
    %1445 = vmatprep.subr.bf16.mxu0 0
    %1446 = vmatpush1.bf16.msra.mxu0 %v1356
    %1447 = vmatprep.subr.bf16.mxu0 0
    %1448 = vmatpush1.bf16.msra.mxu0 %v1366
    %1449 = vmatprep.subr.bf16.mxu0 0
    %1450 = vmatpush1.bf16.msra.mxu0 %v1357
    %1451 = vmatprep.subr.bf16.mxu0 0
    %1452 = vmatpush1.bf16.msra.mxu0 %v1367
    %1453 = vmatprep.subr.bf16.mxu0 0
    %1454 = vmatpush1.bf16.msra.mxu0 %v1358
    %1455 = vmatprep.subr.bf16.mxu0 0
    %1456 = vmatpush1.bf16.msra.mxu0 %v1368
    %1457 = vmatprep.subr.bf16.mxu0 0
    %1458 = vmatpush1.bf16.msra.mxu0 %v1359
    %1459 = vmatprep.subr.bf16.mxu0 0
    %1460 = vmatpush1.bf16.msra.mxu0 %v1369
    %1461 = vmatprep.subr.bf16.mxu0 0
    %1462 = vmatpush1.bf16.msra.mxu0 %v1360
    %1463 = vmatprep.subr.bf16.mxu0 0
    %1464 = vmatpush1.bf16.msra.mxu0 %v1370
    %1465 = vmatprep.subr.bf16.mxu0 0
    %1466 = vmatpush1.bf16.msra.mxu0 %v1361
    %1467 = vmatprep.subr.bf16.mxu0 0
    %1468 = vmatpush1.bf16.msra.mxu0 %v1371
    %1469 = vmatprep.subr.bf16.mxu0 0
    %1470 = vmatpush1.bf16.msra.mxu0 %v1362
    %1471 = vmatprep.subr.bf16.mxu0 0
    %1472 = vmatpush1.bf16.msra.mxu0 %v1372
    %1473 = vmatprep.subr.bf16.mxu0 0
    %1474 = vmatpush1.bf16.msra.mxu0 %v1363
    %1475 = vmatprep.subr.bf16.mxu0 0
    %1476 = vmatpush1.bf16.msra.mxu0 %v1373
    %1477 = vmatprep.mubr.bf16.mxu0 %v1429
    %1478 = vmatmul.mubr.bf16.gmra.mrb[0].mxu0 %v1428
    %v1479 = vpop.f32.mrb[0].mxu0
    %v1480 = vadd.f32 %v1391, %v1479
    %v1481 = vpop.f32.mrb[0].mxu0
    %v1482 = vpop.f32.mrb[0].mxu0
    %v1483 = vadd.f32 %v1396, %v1482
    %v1484 = vpop.f32.mrb[0].mxu0
    %1485 = vmatprep.mubr.bf16.mxu0 %v1432
    %1486 = vmatmul.mubr.bf16.gmra.mrb[0].mxu0 %v1431
    %v1487 = vpop.f32.mrb[0].mxu0
    %v1488 = vadd.f32 %v1401, %v1487
    %v1489 = vpop.f32.mrb[0].mxu0
    %v1490 = vpop.f32.mrb[0].mxu0
    %v1491 = vadd.f32 %v1406, %v1490
    %v1492 = vpop.f32.mrb[0].mxu0
    %1493 = vdwg.mxu0
    %1494 = vmatprep.subr.bf16.mxu0 0
    %1495 = vmatpush1.bf16.msra.mxu0 %v1364
    %1496 = vmatprep.subr.bf16.mxu0 0
    %1497 = vmatpush1.bf16.msra.mxu0 %v1374
    %1498 = vmatprep.subr.bf16.mxu0 0
    %1499 = vmatpush1.bf16.msra.mxu0 %v1365
    %1500 = vmatprep.subr.bf16.mxu0 0
    %1501 = vmatpush1.bf16.msra.mxu0 %v1375
    %1502 = vmatprep.subr.bf16.mxu0 0
    %1503 = vmatpush1.bf16.msra.mxu0 0
    %1504 = vmatprep.subr.bf16.mxu0 0
    %1505 = vmatpush1.bf16.msra.mxu0 0
    %1506 = vmatprep.subr.bf16.mxu0 0
    %1507 = vmatpush1.bf16.msra.mxu0 0
    %1508 = vmatprep.subr.bf16.mxu0 0
    %1509 = vmatpush1.bf16.msra.mxu0 0
    %1510 = vmatprep.subr.bf16.mxu0 0
    %1511 = vmatpush1.bf16.msra.mxu0 0
    %1512 = vmatprep.subr.bf16.mxu0 0
    %1513 = vmatpush1.bf16.msra.mxu0 0
    %1514 = vmatprep.subr.bf16.mxu0 0
    %1515 = vmatpush1.bf16.msra.mxu0 0
    %1516 = vmatprep.subr.bf16.mxu0 0
    %1517 = vmatpush1.bf16.msra.mxu0 0
    %1518 = vmatprep.subr.bf16.mxu0 0
    %1519 = vmatpush1.bf16.msra.mxu0 0
    %1520 = vmatprep.subr.bf16.mxu0 0
    %1521 = vmatpush1.bf16.msra.mxu0 0
    %1522 = vmatprep.subr.bf16.mxu0 0
    %1523 = vmatpush1.bf16.msra.mxu0 0
    %1524 = vmatprep.subr.bf16.mxu0 0
    %1525 = vmatpush1.bf16.msra.mxu0 0
    %1526 = vmatprep.mubr.bf16.mxu0 0
    %1527 = vmatmul.mubr.bf16.gmra.mrb[0].mxu0 %v1440
    %v1528 = vpop.f32.mrb[0].mxu0
    %v1529 = vadd.f32 %v1480, %v1528
    %v1530 = vpop.f32.mrb[0].mxu0
    %v1531 = vpop.f32.mrb[0].mxu0
    %v1532 = vadd.f32 %v1483, %v1531
    %v1533 = vpop.f32.mrb[0].mxu0
    %1534 = vmatprep.mubr.bf16.mxu0 0
    %1535 = vmatmul.mubr.bf16.gmra.mrb[0].mxu0 %v1443
    %v1536 = vpop.f32.mrb[0].mxu0
    %v1537 = vadd.f32 %v1488, %v1536
    %v1538 = vpop.f32.mrb[0].mxu0
    %v1539 = vpop.f32.mrb[0].mxu0
    %v1540 = vadd.f32 %v1491, %v1539
    %v1541 = vpop.f32.mrb[0].mxu0
    %1542 = vdwg.mxu0
    %v1543 = vmax.f32 %v1529, 0.0
    %v1544 = vmax.f32 %v1532, 0.0
    %v1545 = vmax.f32 %v1537, 0.0
    %v1546 = vmax.f32 %v1540, 0.0
    %v1547 = vld [vmem:[%s7] sm:$0xf]
    %v1548 = vpack.c.bf16 %v1544, %v1543
    %v1549 = vpack.c.bf16 %v1546, %v1545
    %v1550 = vld [vmem:[%s8] sm:$0xff]
    %1552 = vset.pattern.permute.xlu0 0
    %1553 = vperm.xlu0 %1552, %v1550
    %v1554 = vpop.permute.xlu0 %1553
    %v1557 = vsel %vm585, %v1547, 0
    %1559 = vmatprep.subr.bf16.mxu0 0
    %1560 = vmatpush1.bf16.msra.mxu0 %v1548
    %1561 = vmatprep.subr.bf16.mxu0 0
    %1562 = vmatpush1.bf16.msra.mxu0 %v1549
    %1563 = vmatprep.subr.bf16.mxu0 0
    %1564 = vmatpush1.bf16.msra.mxu0 0
    %1565 = vmatprep.subr.bf16.mxu0 0
    %1566 = vmatpush1.bf16.msra.mxu0 0
    %1567 = vmatprep.subr.bf16.mxu0 0
    %1568 = vmatpush1.bf16.msra.mxu0 0
    %1569 = vmatprep.subr.bf16.mxu0 0
    %1570 = vmatpush1.bf16.msra.mxu0 0
    %1571 = vmatprep.subr.bf16.mxu0 0
    %1572 = vmatpush1.bf16.msra.mxu0 0
    %1573 = vmatprep.subr.bf16.mxu0 0
    %1574 = vmatpush1.bf16.msra.mxu0 0
    %1575 = vmatprep.subr.bf16.mxu0 0
    %1576 = vmatpush1.bf16.msra.mxu0 0
    %1577 = vmatprep.subr.bf16.mxu0 0
    %1578 = vmatpush1.bf16.msra.mxu0 0
    %1579 = vmatprep.subr.bf16.mxu0 0
    %1580 = vmatpush1.bf16.msra.mxu0 0
    %1581 = vmatprep.subr.bf16.mxu0 0
    %1582 = vmatpush1.bf16.msra.mxu0 0
    %1583 = vmatprep.subr.bf16.mxu0 0
    %1584 = vmatpush1.bf16.msra.mxu0 0
    %1585 = vmatprep.subr.bf16.mxu0 0
    %1586 = vmatpush1.bf16.msra.mxu0 0
    %1587 = vmatprep.subr.bf16.mxu0 0
    %1588 = vmatpush1.bf16.msra.mxu0 0
    %1589 = vmatprep.subr.bf16.mxu0 0
    %1590 = vmatpush1.bf16.msra.mxu0 0
    %1591 = vmatprep.mubr.bf16.mxu0 0
    %1592 = vmatmul.mubr.bf16.gmra.mrb[0].mxu0 %v1557
    %v1593 = vpop.f32.mrb[0].mxu0
    %v1594 = vadd.f32 %v1554, %v1593
    %v1595 = vpop.f32.mrb[0].mxu0
    %v1596 = vpop.f32.mrb[0].mxu0
    %v1597 = vpop.f32.mrb[0].mxu0
    %1598 = vdwg.mxu0
    %v1599 = vxor.u32 %v1594, 2147483648
    %v1600 = vmul.f32 %v1599, 1.442695
    %v1601 = vpow.pop %v1600
    %v1602 = vadd.f32 %v1601, 1.0
    %v1603 = vrcp.pop %v1602
    %v1604 = vmul.f32 1.0, %v1603
    %1605 = vst [vmem:[#allocation5] sm:$0xff] %v1604
    // Predicated region
    $region42: #{tpu_custom_call.1} parent=1 // pred_check
      _
    $region43: #{tpu_custom_call.1} parent=1 // pred_check_branch
      %1607 = sbr.rel (0) target = $region45
    $region44: #{tpu_custom_call.1} parent=1 // pred_region
      %s1609 = ssub.s32 128, 128
      %1610 = vsyncadd [#allocation4], %s1609
      %s1612 = sshll.u32 [#allocation5], 4
      %s1613 = int_to_ptr.vmem [resolvable:$true] %s1612
      %1615 = dma.vmem_to_hbm [thread:$0]  %s1613, 128, %s9, [#allocation4]
    $region45: #{tpu_custom_call.1} parent=1 // pred_fallthru
      _
    // Predicated region
    $region46: #{tpu_custom_call.1} parent=1 // pred_check
      _
    $region47: #{tpu_custom_call.1} parent=1 // pred_check_branch
      %1617 = sbr.rel (0) target = $region49
    $region48: #{tpu_custom_call.1} parent=1 // pred_region
      %1618 = dma.done [#allocation4], 128
    $region49: #{tpu_custom_call.1} parent=1 // pred_fallthru
      _
    %1619 = vsyncpa [#allocation3], 1
    %1620 = vsyncpa [#allocation4], 1

</llo_original>
